<compile_context>
chip_gen: v7x
topology: tpu7x:2x2x1
jax: 0.10.0
libtpu: 0.0.40
codegen_flags: <defaults>
</compile_context>

<pallas_src>
import jax
import jax.numpy as jnp
from jax.experimental import pallas as pl
from jax.experimental.pallas import tpu as pltpu


# ------------------------------ tiling helper --------------------------------

def _pick_tile(total, max_tile):
    """Largest lane-friendly tile: `total` itself if it fits, otherwise the
    biggest multiple of 128 <= max_tile that divides `total` (fallback:
    a single full-size block)."""
    if total <= max_tile:
        return total
    t = (max_tile // 128) * 128
    while t >= 128:
        if total % t == 0:
            return t
        t -= 128
    return total


# ------------------------------ Pallas kernels -------------------------------

def _phi_kernel(g_ref, w_ref, b_ref, o_ref):
    # phi: 1x1x1 conv == (Ci, Cg) @ (Cg, tile) + bias, lane-dense spatial.
    o_ref[0] = (
        jnp.dot(w_ref[...], g_ref[0], preferred_element_type=jnp.float32)
        + b_ref[...]
    )


def _attention_kernel(p_ref, phi_ref, wt_ref, bt_ref, wp_ref, bp_ref, o_ref):
    # theta: 2x2x2 stride-2 conv expressed as (Ci, 8*Cin) @ (8*Cin, tile).
    theta = (
        jnp.dot(wt_ref[...], p_ref[0], preferred_element_type=jnp.float32)
        + bt_ref[...]
    )
    # relu(theta_x + phi_g)
    s = jnp.maximum(theta + phi_ref[0], 0.0)
    # psi: single-output-channel 1x1x1 conv -> VPU multiply + small sublane
    # reduction (avoids an N=1 MXU matmul); result stays lane-dense.
    att = jnp.sum(s * wp_ref[...], axis=0, keepdims=True) + bp_ref[...]
    o_ref[0] = jax.nn.sigmoid(att)          # dense (1, tile) store


def _gate_bn_kernel(x_ref, f_ref, w_ref, b_ref, z_ref, s1_ref, s2_ref):
    # y = x_g_factor.expand_as(x) * x   (gate broadcast over channel sublanes)
    y = x_ref[0] * f_ref[0]
    # w: 1x1x1 conv == (Cin, Cin) @ (Cin, tile) + bias
    z = jnp.dot(w_ref[...], y, preferred_element_type=jnp.float32) + b_ref[...]
    z_ref[0] = z
    # BatchNorm partial statistics for this block (finalized in the wrapper),
    # so z is not re-read from HBM just to compute mean/var.
    s1_ref[0, 0] = jnp.sum(z, axis=1, keepdims=True)
    s2_ref[0, 0] = jnp.sum(z * z, axis=1, keepdims=True)


# ------------------------------ kernel wrappers -------------------------------

def phi_conv(g3, w, b, max_tile=4096):
    B, Cg, Sg = g3.shape
    Ci = w.shape[0]
    ts = _pick_tile(Sg, max_tile)
    return pl.pallas_call(
        _phi_kernel,
        out_shape=jax.ShapeDtypeStruct((B, Ci, Sg), jnp.float32),
        grid=(B, Sg // ts),
        in_specs=[
            pl.BlockSpec((1, Cg, ts), lambda b, i: (b, 0, i)),
            pl.BlockSpec((Ci, Cg), lambda b, i: (0, 0)),
            pl.BlockSpec((Ci, 1), lambda b, i: (0, 0)),
        ],
        out_specs=pl.BlockSpec((1, Ci, ts), lambda b, i: (b, 0, i)),
        compiler_params=pltpu.CompilerParams(
            dimension_semantics=("parallel", "parallel")),
    )(g3, w, b)


def fused_attention(pT, phi_up, wt, bt, wp, bp, max_tile=2048):
    B, K8, S2 = pT.shape
    Ci = wt.shape[0]
    ts = _pick_tile(S2, max_tile)
    return pl.pallas_call(
        _attention_kernel,
        out_shape=jax.ShapeDtypeStruct((B, 1, S2), jnp.float32),
        grid=(B, S2 // ts),
        in_specs=[
            pl.BlockSpec((1, K8, ts), lambda b, i: (b, 0, i)),
            pl.BlockSpec((1, Ci, ts), lambda b, i: (b, 0, i)),
            pl.BlockSpec((Ci, K8), lambda b, i: (0, 0)),
            pl.BlockSpec((Ci, 1), lambda b, i: (0, 0)),
            pl.BlockSpec((Ci, 1), lambda b, i: (0, 0)),
            pl.BlockSpec((1, 1), lambda b, i: (0, 0)),
        ],
        out_specs=pl.BlockSpec((1, 1, ts), lambda b, i: (b, 0, i)),
        compiler_params=pltpu.CompilerParams(
            dimension_semantics=("parallel", "parallel")),
    )(pT, phi_up, wt, bt, wp, bp)


def gate_conv_bn(x3, f3, w, b, max_tile=4096):
    B, Cin, S = x3.shape
    ts = _pick_tile(S, max_tile)
    nt = S // ts
    return pl.pallas_call(
        _gate_bn_kernel,
        out_shape=(
            jax.ShapeDtypeStruct((B, Cin, S), jnp.float32),
            jax.ShapeDtypeStruct((B, nt, Cin, 1), jnp.float32),
            jax.ShapeDtypeStruct((B, nt, Cin, 1), jnp.float32),
        ),
        grid=(B, nt),
        in_specs=[
            pl.BlockSpec((1, Cin, ts), lambda b, i: (b, 0, i)),
            pl.BlockSpec((1, 1, ts), lambda b, i: (b, 0, i)),
            pl.BlockSpec((Cin, Cin), lambda b, i: (0, 0)),
            pl.BlockSpec((Cin, 1), lambda b, i: (0, 0)),
        ],
        out_specs=(
            pl.BlockSpec((1, Cin, ts), lambda b, i: (b, 0, i)),
            pl.BlockSpec((1, 1, Cin, 1), lambda b, i: (b, i, 0, 0)),
            pl.BlockSpec((1, 1, Cin, 1), lambda b, i: (b, i, 0, 0)),
        ),
        compiler_params=pltpu.CompilerParams(
            dimension_semantics=("parallel", "parallel")),
    )(x3, f3, w, b)


# ---------------------------- JAX glue: trilinear -----------------------------
# Matches F.interpolate(mode='trilinear', align_corners=False): separable
# linear interpolation along D, H, W with src = scale*(dst+0.5)-0.5, clamped.

def _interp_axis(x, axis, out_size):
    in_size = x.shape[axis]
    scale = in_size / out_size
    dst = jnp.arange(out_size, dtype=jnp.float32)
    src = jnp.maximum(scale * (dst + 0.5) - 0.5, 0.0)
    i0 = jnp.clip(jnp.floor(src).astype(jnp.int32), 0, in_size - 1)
    i1 = jnp.clip(i0 + 1, 0, in_size - 1)
    w1 = src - i0.astype(jnp.float32)
    w0 = 1.0 - w1
    shape = [1] * x.ndim
    shape[axis] = out_size
    x0 = jnp.take(x, i0, axis=axis)
    x1 = jnp.take(x, i1, axis=axis)
    return x0 * w0.reshape(shape) + x1 * w1.reshape(shape)


def trilinear_resize(x, out_dhw):
    # x: (B, C, D, H, W) channels-first.
    for axis, size in zip((2, 3, 4), out_dhw):
        x = _interp_axis(x, axis, size)
    return x


# ------------------------------- forward pass ---------------------------------

def attention_gate_forward(x, g, params):
    """x: (B, Cin, D, H, W), g: (B, Cg, Dg, Hg, Wg)  (NCDHW, like PyTorch)."""
    B, Cin, D, H, W = x.shape
    Bg, Cg, Dg, Hg, Wg = g.shape
    if B != Bg:
        raise ValueError("batch size is not matching for feature map and signal")
    Ci = params["theta_w"].shape[0]                 # inter_channels
    D2, H2, W2 = D // 2, H // 2, W // 2
    S, S2, Sg = D * H * W, D2 * H2 * W2, Dg * Hg * Wg

    # --- phi: 1x1x1 conv on g (tiled Pallas kernel) ---
    phi = phi_conv(g.reshape(B, Cg, Sg),
                   params["phi_w"].reshape(Ci, Cg),
                   params["phi_b"].reshape(Ci, 1))
    phi = phi.reshape(B, Ci, Dg, Hg, Wg)
    # interpolate phi_g to theta_x spatial size
    phi_up = trilinear_resize(phi, (D2, H2, W2)).reshape(B, Ci, S2)

    # --- theta patch matrix: (B, 8*Cin, D2*H2*W2), voxels on the lane axis ---
    # TODO(synk): fuse this relayout into _attention_kernel (in-kernel strided
    # sub-slab loads) to save one HBM write+read of x.
    xe = x if (D % 2 == 0 and H % 2 == 0 and W % 2 == 0) else \
        x[:, :, :2 * D2, :2 * H2, :2 * W2]
    x8 = xe.reshape(B, Cin, D2, 2, H2, 2, W2, 2)
    pT = jnp.transpose(x8, (0, 1, 3, 5, 7, 2, 4, 6)).reshape(B, Cin * 8, S2)

    # --- fused theta + add(phi) + relu + psi + sigmoid ---
    att = fused_attention(pT, phi_up,
                          params["theta_w"].reshape(Ci, Cin * 8),
                          params["theta_b"].reshape(Ci, 1),
                          params["psi_w"].reshape(Ci, 1),
                          params["psi_b"].reshape(1, 1))
    att = att.reshape(B, 1, D2, H2, W2)

    # --- upsample gate to x resolution (already native NCDHW layout) ---
    x_g_factor = trilinear_resize(att, (D, H, W))   # (B, 1, D, H, W)

    # --- y = gate * x, w: 1x1x1 conv, BN partial stats, all in one kernel ---
    # TODO(synk): the trilinear gate upsample could additionally be folded into
    # the kernel (scalar-prefetched interp indices) to skip the factor HBM pass.
    z, s1, s2 = gate_conv_bn(x.reshape(B, Cin, S),
                             x_g_factor.reshape(B, 1, S),
                             params["w_w"].reshape(Cin, Cin),
                             params["w_b"].reshape(Cin, 1))

    # --- BatchNorm3d finalize (training-mode batch statistics, affine) ---
    n = jnp.float32(B * S)
    mean = jnp.sum(s1, axis=(0, 1))[:, 0] / n       # (Cin,)
    var = jnp.sum(s2, axis=(0, 1))[:, 0] / n - mean * mean
    z = (z - mean[None, :, None]) * jax.lax.rsqrt(var + 1e-5)[None, :, None]
    z = z * params["bn_gamma"][None, :, None] + params["bn_beta"][None, :, None]

    weighted_y = z.reshape(B, Cin, D, H, W)
    return weighted_y, x_g_factor


# ----------------------------------- main --------------------------------------

if __name__ == "__main__":
    B, Cin, Cg = 2, 4, 6
    D = H = W = 8
    Dg = Hg = Wg = 2
    Ci = Cin  # inter_channels defaults to in_channels

    key = jax.random.PRNGKey(0)
    ks = jax.random.split(key, 10)
    params = {
        "theta_w": jax.random.normal(ks[0], (Ci, Cin, 2, 2, 2), jnp.float32) * 0.1,
        "theta_b": jax.random.normal(ks[1], (Ci,), jnp.float32) * 0.1,
        "phi_w":   jax.random.normal(ks[2], (Ci, Cg, 1, 1, 1), jnp.float32) * 0.1,
        "phi_b":   jax.random.normal(ks[3], (Ci,), jnp.float32) * 0.1,
        "psi_w":   jax.random.normal(ks[4], (1, Ci, 1, 1, 1), jnp.float32) * 0.1,
        "psi_b":   jax.random.normal(ks[5], (1,), jnp.float32) * 0.1,
        "w_w":     jax.random.normal(ks[6], (Cin, Cin, 1, 1, 1), jnp.float32) * 0.1,
        "w_b":     jax.random.normal(ks[7], (Cin,), jnp.float32) * 0.1,
        "bn_gamma": jnp.ones((Cin,), jnp.float32),
        "bn_beta":  jnp.zeros((Cin,), jnp.float32),
    }

    x = jax.random.normal(ks[8], (B, Cin, D, H, W), jnp.float32)
    g = jax.random.normal(ks[9], (B, Cg, Dg, Hg, Wg), jnp.float32)

    weighted_y, x_g_factor = jax.jit(attention_gate_forward)(x, g, params)
    jax.block_until_ready((weighted_y, x_g_factor))

    assert weighted_y.shape == (B, Cin, D, H, W)
    assert x_g_factor.shape == (B, 1, D, H, W)
    assert bool(jnp.all(jnp.isfinite(weighted_y)))
    assert bool(jnp.all((x_g_factor >= 0.0) & (x_g_factor <= 1.0)))
    print("KERNEL_OK")
</pallas_src>

<mosaic_0001>
module attributes {stable_mosaic.version = 11 : i64} {
  func.func @_phi_kernel(%arg0: i32, %arg1: i32, %arg2: memref<1x6x8xf32, #tpu.memory_space<vmem>>, %arg3: memref<4x6xf32, #tpu.memory_space<vmem>>, %arg4: memref<4x1xf32, #tpu.memory_space<vmem>>, %arg5: memref<1x4x8xf32, #tpu.memory_space<vmem>>) attributes {dimension_semantics = [#tpu.dimension_semantics<parallel>, #tpu.dimension_semantics<parallel>], iteration_bounds = array<i64: 2, 1>, scalar_prefetch = 0 : i64, scratch_operands = 0 : i64, tpu.core_type = #tpu.core_type<tc>, window_params = [{transform_indices = @transform_0, window_bounds = array<i64: 1, 6, 8>}, {pipeline_mode = #tpu.pipeline_mode<synchronous>, transform_indices = @transform_1, window_bounds = array<i64: 4, 6>}, {pipeline_mode = #tpu.pipeline_mode<synchronous>, transform_indices = @transform_2, window_bounds = array<i64: 4, 1>}, {transform_indices = @transform_3, window_bounds = array<i64: 1, 4, 8>}]} {
    %c0 = arith.constant 0 : index
    %c0_0 = arith.constant 0 : index
    %0 = vector.load %arg3[%c0, %c0_0] : memref<4x6xf32, #tpu.memory_space<vmem>>, vector<4x6xf32>
    %c0_1 = arith.constant 0 : index
    %c0_2 = arith.constant 0 : index
    %c0_3 = arith.constant 0 : index
    %1 = vector.load %arg2[%c0_1, %c0_2, %c0_3] : memref<1x6x8xf32, #tpu.memory_space<vmem>>, vector<1x6x8xf32>
    %2 = vector.shape_cast %1 : vector<1x6x8xf32> to vector<6x8xf32>
    %cst = arith.constant dense<0.000000e+00> : vector<4x8xf32>
    %3 = tpu.matmul %0, %2, %cst {dimension_numbers = #tpu.dot_dimension_numbers<[1], [0], [0], [1], [0, 0, 1, 1], [], []>} : vector<4x6xf32>, vector<6x8xf32>, vector<4x8xf32> -> vector<4x8xf32>
    %c0_4 = arith.constant 0 : index
    %c0_5 = arith.constant 0 : index
    %4 = vector.load %arg4[%c0_4, %c0_5] : memref<4x1xf32, #tpu.memory_space<vmem>>, vector<4x1xf32>
    %5 = vector.broadcast %4 : vector<4x1xf32> to vector<4x8xf32>
    %6 = arith.addf %3, %5 : vector<4x8xf32>
    %c0_6 = arith.constant 0 : index
    %c0_7 = arith.constant 0 : index
    %c0_8 = arith.constant 0 : index
    %7 = vector.load %arg5[%c0_6, %c0_7, %c0_8] : memref<1x4x8xf32, #tpu.memory_space<vmem>>, vector<1x4x8xf32>
    %8 = vector.shape_cast %7 : vector<1x4x8xf32> to vector<4x8xf32>
    %9 = vector.shape_cast %6 : vector<4x8xf32> to vector<1x4x8xf32>
    tpu.vector_store %arg5[%c0_6, %c0_7, %c0_8], %9 {strides = array<i32>} : memref<1x4x8xf32, #tpu.memory_space<vmem>>, vector<1x4x8xf32>,
    return
  }
  func.func @transform_0(%arg0: i32, %arg1: i32) -> (i32, i32, i32) {
    %c0_i32 = arith.constant 0 : i32
    %c0_i32_0 = arith.constant 0 : i32
    return %arg0, %c0_i32, %arg1 : i32, i32, i32
  }
  func.func @transform_1(%arg0: i32, %arg1: i32) -> (i32, i32) {
    %c0_i32 = arith.constant 0 : i32
    %c0_i32_0 = arith.constant 0 : i32
    %c0_i32_1 = arith.constant 0 : i32
    return %c0_i32, %c0_i32_0 : i32, i32
  }
  func.func @transform_2(%arg0: i32, %arg1: i32) -> (i32, i32) {
    %c0_i32 = arith.constant 0 : i32
    %c0_i32_0 = arith.constant 0 : i32
    %c0_i32_1 = arith.constant 0 : i32
    return %c0_i32, %c0_i32_0 : i32, i32
  }
  func.func @transform_3(%arg0: i32, %arg1: i32) -> (i32, i32, i32) {
    %c0_i32 = arith.constant 0 : i32
    %c0_i32_0 = arith.constant 0 : i32
    return %arg0, %c0_i32, %arg1 : i32, i32, i32
  }
}

module attributes {stable_mosaic.version = 11 : i64} {
  func.func @_attention_kernel(%arg0: i32, %arg1: i32, %arg2: memref<1x32x64xf32, #tpu.memory_space<vmem>>, %arg3: memref<1x4x64xf32, #tpu.memory_space<vmem>>, %arg4: memref<4x32xf32, #tpu.memory_space<vmem>>, %arg5: memref<4x1xf32, #tpu.memory_space<vmem>>, %arg6: memref<4x1xf32, #tpu.memory_space<vmem>>, %arg7: memref<1x1xf32, #tpu.memory_space<vmem>>, %arg8: memref<1x1x64xf32, #tpu.memory_space<vmem>>) attributes {dimension_semantics = [#tpu.dimension_semantics<parallel>, #tpu.dimension_semantics<parallel>], iteration_bounds = array<i64: 2, 1>, scalar_prefetch = 0 : i64, scratch_operands = 0 : i64, tpu.core_type = #tpu.core_type<tc>, window_params = [{transform_indices = @transform_0, window_bounds = array<i64: 1, 32, 64>}, {transform_indices = @transform_1, window_bounds = array<i64: 1, 4, 64>}, {pipeline_mode = #tpu.pipeline_mode<synchronous>, transform_indices = @transform_2, window_bounds = array<i64: 4, 32>}, {pipeline_mode = #tpu.pipeline_mode<synchronous>, transform_indices = @transform_3, window_bounds = array<i64: 4, 1>}, {pipeline_mode = #tpu.pipeline_mode<synchronous>, transform_indices = @transform_4, window_bounds = array<i64: 4, 1>}, {pipeline_mode = #tpu.pipeline_mode<synchronous>, transform_indices = @transform_5, window_bounds = array<i64: 1, 1>}, {transform_indices = @transform_6, window_bounds = array<i64: 1, 1, 64>}]} {
    %c0 = arith.constant 0 : index
    %c0_0 = arith.constant 0 : index
    %0 = vector.load %arg4[%c0, %c0_0] : memref<4x32xf32, #tpu.memory_space<vmem>>, vector<4x32xf32>
    %c0_1 = arith.constant 0 : index
    %c0_2 = arith.constant 0 : index
    %c0_3 = arith.constant 0 : index
    %1 = vector.load %arg2[%c0_1, %c0_2, %c0_3] : memref<1x32x64xf32, #tpu.memory_space<vmem>>, vector<1x32x64xf32>
    %2 = vector.shape_cast %1 : vector<1x32x64xf32> to vector<32x64xf32>
    %cst = arith.constant dense<0.000000e+00> : vector<4x64xf32>
    %3 = tpu.matmul %0, %2, %cst {dimension_numbers = #tpu.dot_dimension_numbers<[1], [0], [0], [1], [0, 0, 1, 1], [], []>} : vector<4x32xf32>, vector<32x64xf32>, vector<4x64xf32> -> vector<4x64xf32>
    %c0_4 = arith.constant 0 : index
    %c0_5 = arith.constant 0 : index
    %4 = vector.load %arg5[%c0_4, %c0_5] : memref<4x1xf32, #tpu.memory_space<vmem>>, vector<4x1xf32>
    %5 = vector.broadcast %4 : vector<4x1xf32> to vector<4x64xf32>
    %6 = arith.addf %3, %5 : vector<4x64xf32>
    %c0_6 = arith.constant 0 : index
    %c0_7 = arith.constant 0 : index
    %c0_8 = arith.constant 0 : index
    %7 = vector.load %arg3[%c0_6, %c0_7, %c0_8] : memref<1x4x64xf32, #tpu.memory_space<vmem>>, vector<1x4x64xf32>
    %8 = vector.shape_cast %7 : vector<1x4x64xf32> to vector<4x64xf32>
    %9 = arith.addf %6, %8 : vector<4x64xf32>
    %cst_9 = arith.constant 0.000000e+00 : f32
    %10 = vector.broadcast %cst_9 : f32 to vector<4x64xf32>
    %11 = arith.maximumf %9, %10 : vector<4x64xf32>
    %c0_10 = arith.constant 0 : index
    %c0_11 = arith.constant 0 : index
    %12 = vector.load %arg6[%c0_10, %c0_11] : memref<4x1xf32, #tpu.memory_space<vmem>>, vector<4x1xf32>
    %13 = vector.broadcast %12 : vector<4x1xf32> to vector<4x64xf32>
    %14 = arith.mulf %11, %13 : vector<4x64xf32>
    %cst_12 = arith.constant dense<0.000000e+00> : vector<64xf32>
    %15 = vector.multi_reduction <add>, %14, %cst_12 [0] : vector<4x64xf32> to vector<64xf32>
    %16 = vector.shape_cast %15 : vector<64xf32> to vector<1x64xf32>
    %c0_13 = arith.constant 0 : index
    %c0_14 = arith.constant 0 : index
    %17 = vector.load %arg7[%c0_13, %c0_14] : memref<1x1xf32, #tpu.memory_space<vmem>>, vector<1x1xf32>
    %18 = vector.broadcast %17 : vector<1x1xf32> to vector<1x64xf32>
    %19 = arith.addf %16, %18 : vector<1x64xf32>
    %20 = arith.negf %19 : vector<1x64xf32>
    %21 = math.exp %20 : vector<1x64xf32>
    %cst_15 = arith.constant 1.000000e+00 : f32
    %22 = vector.broadcast %cst_15 : f32 to vector<1x64xf32>
    %23 = arith.addf %22, %21 : vector<1x64xf32>
    %24 = arith.divf %22, %23 : vector<1x64xf32>
    %c0_16 = arith.constant 0 : index
    %c0_17 = arith.constant 0 : index
    %c0_18 = arith.constant 0 : index
    %25 = vector.load %arg8[%c0_16, %c0_17, %c0_18] : memref<1x1x64xf32, #tpu.memory_space<vmem>>, vector<1x1x64xf32>
    %26 = vector.shape_cast %25 : vector<1x1x64xf32> to vector<1x64xf32>
    %27 = vector.shape_cast %24 : vector<1x64xf32> to vector<1x1x64xf32>
    tpu.vector_store %arg8[%c0_16, %c0_17, %c0_18], %27 {strides = array<i32>} : memref<1x1x64xf32, #tpu.memory_space<vmem>>, vector<1x1x64xf32>,
    return
  }
  func.func @transform_0(%arg0: i32, %arg1: i32) -> (i32, i32, i32) {
    %c0_i32 = arith.constant 0 : i32
    %c0_i32_0 = arith.constant 0 : i32
    return %arg0, %c0_i32, %arg1 : i32, i32, i32
  }
  func.func @transform_1(%arg0: i32, %arg1: i32) -> (i32, i32, i32) {
    %c0_i32 = arith.constant 0 : i32
    %c0_i32_0 = arith.constant 0 : i32
    return %arg0, %c0_i32, %arg1 : i32, i32, i32
  }
  func.func @transform_2(%arg0: i32, %arg1: i32) -> (i32, i32) {
    %c0_i32 = arith.constant 0 : i32
    %c0_i32_0 = arith.constant 0 : i32
    %c0_i32_1 = arith.constant 0 : i32
    return %c0_i32, %c0_i32_0 : i32, i32
  }
  func.func @transform_3(%arg0: i32, %arg1: i32) -> (i32, i32) {
    %c0_i32 = arith.constant 0 : i32
    %c0_i32_0 = arith.constant 0 : i32
    %c0_i32_1 = arith.constant 0 : i32
    return %c0_i32, %c0_i32_0 : i32, i32
  }
  func.func @transform_4(%arg0: i32, %arg1: i32) -> (i32, i32) {
    %c0_i32 = arith.constant 0 : i32
    %c0_i32_0 = arith.constant 0 : i32
    %c0_i32_1 = arith.constant 0 : i32
    return %c0_i32, %c0_i32_0 : i32, i32
  }
  func.func @transform_5(%arg0: i32, %arg1: i32) -> (i32, i32) {
    %c0_i32 = arith.constant 0 : i32
    %c0_i32_0 = arith.constant 0 : i32
    %c0_i32_1 = arith.constant 0 : i32
    return %c0_i32, %c0_i32_0 : i32, i32
  }
  func.func @transform_6(%arg0: i32, %arg1: i32) -> (i32, i32, i32) {
    %c0_i32 = arith.constant 0 : i32
    %c0_i32_0 = arith.constant 0 : i32
    return %arg0, %c0_i32, %arg1 : i32, i32, i32
  }
}

module attributes {stable_mosaic.version = 11 : i64} {
  func.func @_gate_bn_kernel(%arg0: i32, %arg1: i32, %arg2: memref<1x4x512xf32, #tpu.memory_space<vmem>>, %arg3: memref<1x1x512xf32, #tpu.memory_space<vmem>>, %arg4: memref<4x4xf32, #tpu.memory_space<vmem>>, %arg5: memref<4x1xf32, #tpu.memory_space<vmem>>, %arg6: memref<1x4x512xf32, #tpu.memory_space<vmem>>, %arg7: memref<1x1x4x1xf32, #tpu.memory_space<vmem>>, %arg8: memref<1x1x4x1xf32, #tpu.memory_space<vmem>>) attributes {dimension_semantics = [#tpu.dimension_semantics<parallel>, #tpu.dimension_semantics<parallel>], iteration_bounds = array<i64: 2, 1>, scalar_prefetch = 0 : i64, scratch_operands = 0 : i64, tpu.core_type = #tpu.core_type<tc>, window_params = [{transform_indices = @transform_0, window_bounds = array<i64: 1, 4, 512>}, {transform_indices = @transform_1, window_bounds = array<i64: 1, 1, 512>}, {pipeline_mode = #tpu.pipeline_mode<synchronous>, transform_indices = @transform_2, window_bounds = array<i64: 4, 4>}, {pipeline_mode = #tpu.pipeline_mode<synchronous>, transform_indices = @transform_3, window_bounds = array<i64: 4, 1>}, {transform_indices = @transform_4, window_bounds = array<i64: 1, 4, 512>}, {transform_indices = @transform_5, window_bounds = array<i64: 1, 1, 4, 1>}, {transform_indices = @transform_6, window_bounds = array<i64: 1, 1, 4, 1>}]} {
    %c0 = arith.constant 0 : index
    %c0_0 = arith.constant 0 : index
    %c0_1 = arith.constant 0 : index
    %0 = vector.load %arg2[%c0, %c0_0, %c0_1] : memref<1x4x512xf32, #tpu.memory_space<vmem>>, vector<1x4x512xf32>
    %1 = vector.shape_cast %0 : vector<1x4x512xf32> to vector<4x512xf32>
    %c0_2 = arith.constant 0 : index
    %c0_3 = arith.constant 0 : index
    %c0_4 = arith.constant 0 : index
    %2 = vector.load %arg3[%c0_2, %c0_3, %c0_4] : memref<1x1x512xf32, #tpu.memory_space<vmem>>, vector<1x1x512xf32>
    %3 = vector.shape_cast %2 : vector<1x1x512xf32> to vector<1x512xf32>
    %4 = vector.broadcast %3 : vector<1x512xf32> to vector<4x512xf32>
    %5 = arith.mulf %1, %4 : vector<4x512xf32>
    %c0_5 = arith.constant 0 : index
    %c0_6 = arith.constant 0 : index
    %6 = vector.load %arg4[%c0_5, %c0_6] : memref<4x4xf32, #tpu.memory_space<vmem>>, vector<4x4xf32>
    %cst = arith.constant dense<0.000000e+00> : vector<4x512xf32>
    %7 = tpu.matmul %6, %5, %cst {dimension_numbers = #tpu.dot_dimension_numbers<[1], [0], [0], [1], [0, 0, 1, 1], [], []>} : vector<4x4xf32>, vector<4x512xf32>, vector<4x512xf32> -> vector<4x512xf32>
    %c0_7 = arith.constant 0 : index
    %c0_8 = arith.constant 0 : index
    %8 = vector.load %arg5[%c0_7, %c0_8] : memref<4x1xf32, #tpu.memory_space<vmem>>, vector<4x1xf32>
    %9 = vector.broadcast %8 : vector<4x1xf32> to vector<4x512xf32>
    %10 = arith.addf %7, %9 : vector<4x512xf32>
    %c0_9 = arith.constant 0 : index
    %c0_10 = arith.constant 0 : index
    %c0_11 = arith.constant 0 : index
    %11 = vector.load %arg6[%c0_9, %c0_10, %c0_11] : memref<1x4x512xf32, #tpu.memory_space<vmem>>, vector<1x4x512xf32>
    %12 = vector.shape_cast %11 : vector<1x4x512xf32> to vector<4x512xf32>
    %13 = vector.shape_cast %10 : vector<4x512xf32> to vector<1x4x512xf32>
    tpu.vector_store %arg6[%c0_9, %c0_10, %c0_11], %13 {strides = array<i32>} : memref<1x4x512xf32, #tpu.memory_space<vmem>>, vector<1x4x512xf32>,
    %cst_12 = arith.constant dense<0.000000e+00> : vector<4xf32>
    %14 = vector.multi_reduction <add>, %10, %cst_12 [1] : vector<4x512xf32> to vector<4xf32>
    %15 = vector.shape_cast %14 : vector<4xf32> to vector<4x1xf32>
    %c0_13 = arith.constant 0 : index
    %c0_14 = arith.constant 0 : index
    %c0_15 = arith.constant 0 : index
    %c0_16 = arith.constant 0 : index
    %16 = vector.load %arg7[%c0_13, %c0_14, %c0_15, %c0_16] : memref<1x1x4x1xf32, #tpu.memory_space<vmem>>, vector<1x1x4x1xf32>
    %17 = vector.shape_cast %16 : vector<1x1x4x1xf32> to vector<4x1xf32>
    %18 = vector.shape_cast %15 : vector<4x1xf32> to vector<1x1x4x1xf32>
    tpu.vector_store %arg7[%c0_13, %c0_14, %c0_15, %c0_16], %18 {strides = array<i32>} : memref<1x1x4x1xf32, #tpu.memory_space<vmem>>, vector<1x1x4x1xf32>,
    %19 = arith.mulf %10, %10 : vector<4x512xf32>
    %cst_17 = arith.constant dense<0.000000e+00> : vector<4xf32>
    %20 = vector.multi_reduction <add>, %19, %cst_17 [1] : vector<4x512xf32> to vector<4xf32>
    %21 = vector.shape_cast %20 : vector<4xf32> to vector<4x1xf32>
    %c0_18 = arith.constant 0 : index
    %c0_19 = arith.constant 0 : index
    %c0_20 = arith.constant 0 : index
    %c0_21 = arith.constant 0 : index
    %22 = vector.load %arg8[%c0_18, %c0_19, %c0_20, %c0_21] : memref<1x1x4x1xf32, #tpu.memory_space<vmem>>, vector<1x1x4x1xf32>
    %23 = vector.shape_cast %22 : vector<1x1x4x1xf32> to vector<4x1xf32>
    %24 = vector.shape_cast %21 : vector<4x1xf32> to vector<1x1x4x1xf32>
    tpu.vector_store %arg8[%c0_18, %c0_19, %c0_20, %c0_21], %24 {strides = array<i32>} : memref<1x1x4x1xf32, #tpu.memory_space<vmem>>, vector<1x1x4x1xf32>,
    return
  }
  func.func @transform_0(%arg0: i32, %arg1: i32) -> (i32, i32, i32) {
    %c0_i32 = arith.constant 0 : i32
    %c0_i32_0 = arith.constant 0 : i32
    return %arg0, %c0_i32, %arg1 : i32, i32, i32
  }
  func.func @transform_1(%arg0: i32, %arg1: i32) -> (i32, i32, i32) {
    %c0_i32 = arith.constant 0 : i32
    %c0_i32_0 = arith.constant 0 : i32
    return %arg0, %c0_i32, %arg1 : i32, i32, i32
  }
  func.func @transform_2(%arg0: i32, %arg1: i32) -> (i32, i32) {
    %c0_i32 = arith.constant 0 : i32
    %c0_i32_0 = arith.constant 0 : i32
    %c0_i32_1 = arith.constant 0 : i32
    return %c0_i32, %c0_i32_0 : i32, i32
  }
  func.func @transform_3(%arg0: i32, %arg1: i32) -> (i32, i32) {
    %c0_i32 = arith.constant 0 : i32
    %c0_i32_0 = arith.constant 0 : i32
    %c0_i32_1 = arith.constant 0 : i32
    return %c0_i32, %c0_i32_0 : i32, i32
  }
  func.func @transform_4(%arg0: i32, %arg1: i32) -> (i32, i32, i32) {
    %c0_i32 = arith.constant 0 : i32
    %c0_i32_0 = arith.constant 0 : i32
    return %arg0, %c0_i32, %arg1 : i32, i32, i32
  }
  func.func @transform_5(%arg0: i32, %arg1: i32) -> (i32, i32, i32, i32) {
    %c0_i32 = arith.constant 0 : i32
    %c0_i32_0 = arith.constant 0 : i32
    %c0_i32_1 = arith.constant 0 : i32
    return %arg0, %arg1, %c0_i32, %c0_i32_0 : i32, i32, i32, i32
  }
  func.func @transform_6(%arg0: i32, %arg1: i32) -> (i32, i32, i32, i32) {
    %c0_i32 = arith.constant 0 : i32
    %c0_i32_0 = arith.constant 0 : i32
    %c0_i32_1 = arith.constant 0 : i32
    return %arg0, %arg1, %c0_i32, %c0_i32_0 : i32, i32, i32, i32
  }
}

</mosaic_0001>

<llo_original>
// kernel: attention_gate_forward.3
$region0: #{attention_gate_forward.3}
  #allocation0 [shape = 'u32[]', space=smem, size = 0x4, offset = 0x4, fixed_abs, tag = 'smem constant byte address 0x4 - core index']
  #allocation1 [shape = 'u32[144,128]{1,0:T(1,128)}', space=vmem, size = 0x12000, scoped, tag = 'internal scratch']
  %s0 = inlined_call_operand.vmem [shape: f32[2,6,8], index: 0, kind: input, shape index: {}]
  %s1 = inlined_call_operand.vmem [shape: f32[4,6], index: 1, kind: input, shape index: {}]
  %s2 = inlined_call_operand.vmem [shape: f32[4,1], index: 2, kind: input, shape index: {}]
  %s3 = inlined_call_operand.vmem [shape: f32[2,4,8], index: 3, kind: output, shape index: {}]
  %s4 = sld [smem:[#allocation0]]
  $region45: #{attention_gate_forward.3} parent=0
    _
  %s6 = ssub.s32 1, %s4
  %s7 = scalar_select 0, %s6, %s4
  loop: start=0, step=1, limit=4
  $region2: #{attention_gate_forward.3} parent=0 // loop_pre_header
    _
  $region3: #{attention_gate_forward.3} parent=0 // loop_header
    %s9 = sphi 0, %s13
    %p10 = scmp.ge.s32.totalorder %s9, 4
    %s16 = sphi 0, %s28
    %s17 = sphi 0, %s24
    %s18 = sphi 0, %s16
    %s19 = sphi 0, %s17
    %s20 = sphi 0, %s18
    %s21 = sphi 0, %s19
    %s33 = sphi 0, %s35
    %s36 = sphi 0, %s33
    %s37 = sphi 0, %s36
    %s53 = sphi 0, %s37
    %s57 = sphi 0, %s57
    %s59 = sphi 0, %s57
    %s60 = sphi 0, %s59
    %s74 = sphi 0, %s60
    %s78 = sphi 0, %s78
    %s80 = sphi 0, %s78
    %s81 = sphi 0, %s80
    %s95 = sphi 0, %s81
    %s103 = sphi 0, %s105
    %s106 = sphi 0, %s103
    %s107 = sphi 0, %s106
    %s123 = sphi 0, %s107
  $region4: #{attention_gate_forward.3} parent=0 // loop_header_branch
    %12 = sbr.rel (%p10) target = $region8
  $region5: #{attention_gate_forward.3} parent=0 // loop_body
    %s14 = ssub.s32 %s9, 1
    %s15 = ssub.s32 %s9, 2
    %s22 = sadd.s32 1, %s17
    %p23 = scmp.ge.s32.totalorder %s22, 1
    %s24 = scalar_select %p23, 0, %s22
    %s25 = sadd.s32 1, %s16
    %s26 = scalar_select %p23, %s25, %s16
    %p27 = scmp.ge.s32.totalorder %s26, 2
    %s28 = scalar_select %p27, 0, %s26
    %s29 = ssub.s32 %s16, %s28
    %s30 = ssub.s32 %s17, %s24
    %s31 = sor.u32 %s29, %s30
    %p32 = scmp.eq.s32.totalorder %s31, 0
    %s34 = sadd.s32 %s33, 1
    %s35 = scalar_select %p32, %s33, %s34
    %p38 = pneg %p32
    %p39 = scmp.eq.s32.totalorder %s9, 1
    %p40 = por %p38, %p39
    %p41 = scmp.ne.s32.totalorder %s33, %s36
    %p42 = scmp.eq.s32.totalorder %s9, 0
    %p43 = por %p41, %p42
    %p44 = scmp.ne.s32.totalorder %s33, %s36
    %p45 = scmp.eq.s32.totalorder %s14, 1
    %p46 = por %p44, %p45
    %p47 = scmp.ne.s32.totalorder %s36, %s37
    %p48 = scmp.eq.s32.totalorder %s14, 0
    %p49 = por %p47, %p48
    %p50 = scmp.ne.s32.totalorder %s36, %s37
    %p51 = scmp.eq.s32.totalorder %s15, 1
    %p52 = por %p50, %p51
    %p54 = scmp.ne.s32.totalorder %s37, %s53
    %p55 = scmp.eq.s32.totalorder %s15, 0
    %p56 = por %p54, %p55
    %s58 = sadd.s32 %s57, 1
    %p61 = scmp.eq.s32.totalorder %s9, 1
    %p62 = scmp.ne.s32.totalorder %s57, %s59
    %p63 = scmp.eq.s32.totalorder %s9, 0
    %p64 = por %p62, %p63
    %p65 = scmp.ne.s32.totalorder %s57, %s59
    %p66 = scmp.eq.s32.totalorder %s14, 1
    %p67 = por %p65, %p66
    %p68 = scmp.ne.s32.totalorder %s59, %s60
    %p69 = scmp.eq.s32.totalorder %s14, 0
    %p70 = por %p68, %p69
    %p71 = scmp.ne.s32.totalorder %s59, %s60
    %p72 = scmp.eq.s32.totalorder %s15, 1
    %p73 = por %p71, %p72
    %p75 = scmp.ne.s32.totalorder %s60, %s74
    %p76 = scmp.eq.s32.totalorder %s15, 0
    %p77 = por %p75, %p76
    %s79 = sadd.s32 %s78, 1
    %p82 = scmp.eq.s32.totalorder %s9, 1
    %p83 = scmp.ne.s32.totalorder %s78, %s80
    %p84 = scmp.eq.s32.totalorder %s9, 0
    %p85 = por %p83, %p84
    %p86 = scmp.ne.s32.totalorder %s78, %s80
    %p87 = scmp.eq.s32.totalorder %s14, 1
    %p88 = por %p86, %p87
    %p89 = scmp.ne.s32.totalorder %s80, %s81
    %p90 = scmp.eq.s32.totalorder %s14, 0
    %p91 = por %p89, %p90
    %p92 = scmp.ne.s32.totalorder %s80, %s81
    %p93 = scmp.eq.s32.totalorder %s15, 1
    %p94 = por %p92, %p93
    %p96 = scmp.ne.s32.totalorder %s81, %s95
    %p97 = scmp.eq.s32.totalorder %s15, 0
    %p98 = por %p96, %p97
    %s99 = ssub.s32 %s16, %s28
    %s100 = ssub.s32 %s17, %s24
    %s101 = sor.u32 %s99, %s100
    %p102 = scmp.eq.s32.totalorder %s101, 0
    %s104 = sadd.s32 %s103, 1
    %s105 = scalar_select %p102, %s103, %s104
    %p108 = pneg %p102
    %p109 = scmp.eq.s32.totalorder %s9, 1
    %p110 = por %p108, %p109
    %p111 = scmp.ne.s32.totalorder %s103, %s106
    %p112 = scmp.eq.s32.totalorder %s9, 0
    %p113 = por %p111, %p112
    %p114 = scmp.ne.s32.totalorder %s103, %s106
    %p115 = scmp.eq.s32.totalorder %s14, 1
    %p116 = por %p114, %p115
    %p117 = scmp.ne.s32.totalorder %s106, %s107
    %p118 = scmp.eq.s32.totalorder %s14, 0
    %p119 = por %p117, %p118
    %p120 = scmp.ne.s32.totalorder %s106, %s107
    %p121 = scmp.eq.s32.totalorder %s15, 1
    %p122 = por %p120, %p121
    %p124 = scmp.ne.s32.totalorder %s107, %s123
    %p125 = scmp.eq.s32.totalorder %s15, 0
    %p126 = por %p124, %p125
    %p127 = scmp.le.s32.totalorder 1, %s9
    %p128 = scmp.lt.s32.totalorder %s9, 3
    %p129 = pnand %p127, %p128
    %p130 = pneg %p129
    // Predicated region
    $region9: #{attention_gate_forward.3} parent=5 // pred_check
      _
    $region10: #{attention_gate_forward.3} parent=5 // pred_check_branch
      %132 = sbr.rel (%p129) target = $region12
    $region11: #{attention_gate_forward.3} parent=5 // pred_region
      %s133 = ssub.s32 %s9, 1
      // Predicated region
      $region13: #{attention_gate_forward.3} parent=11 // pred_check
        %p134 = pneg %p70
      $region14: #{attention_gate_forward.3} parent=11 // pred_check_branch
        %136 = sbr.rel (%p134) target = $region16
      $region15: #{attention_gate_forward.3} parent=11 // pred_region
        _
      $region16: #{attention_gate_forward.3} parent=11 // pred_fallthru
        _
      // Predicated region
      $region17: #{attention_gate_forward.3} parent=11 // pred_check
        %p137 = pneg %p91
      $region18: #{attention_gate_forward.3} parent=11 // pred_check_branch
        %139 = sbr.rel (%p137) target = $region20
      $region19: #{attention_gate_forward.3} parent=11 // pred_region
        _
      $region20: #{attention_gate_forward.3} parent=11 // pred_fallthru
        _
    $region12: #{attention_gate_forward.3} parent=5 // pred_fallthru
      _
    %p140 = scmp.lt.s32.totalorder %s9, 2
    // Predicated region
    $region21: #{attention_gate_forward.3} parent=5 // pred_check
      %p141 = pneg %p140
    $region22: #{attention_gate_forward.3} parent=5 // pred_check_branch
      %143 = sbr.rel (%p141) target = $region24
    $region23: #{attention_gate_forward.3} parent=5 // pred_region
      // Predicated region
      $region25: #{attention_gate_forward.3} parent=23 // pred_check
        %p144 = pneg %p43
      $region26: #{attention_gate_forward.3} parent=23 // pred_check_branch
        %146 = sbr.rel (%p144) target = $region28
      $region27: #{attention_gate_forward.3} parent=23 // pred_region
        %p147 = scmp.lt.s32.totalorder %s16, 1
        %s148 = scalar_select %p147, %s16, 1
        %p149 = scmp.lt.s32.totalorder %s17, 0
        %s150 = scalar_select %p149, %s17, 0
        %s151 = sadd.s32 %s150, %s148
        %s152 = smul.addr %s151, 8
        %s153 = scalar_lea.vmem %s0, %s152
      $region28: #{attention_gate_forward.3} parent=23 // pred_fallthru
        _
    $region24: #{attention_gate_forward.3} parent=5 // pred_fallthru
      _
    %p154 = scmp.le.s32.totalorder 1, %s9
    %p155 = scmp.lt.s32.totalorder %s9, 3
    %p156 = pnand %p154, %p155
    %p157 = pneg %p156
    // Predicated region
    $region29: #{attention_gate_forward.3} parent=5 // pred_check
      _
    $region30: #{attention_gate_forward.3} parent=5 // pred_check_branch
      %159 = sbr.rel (%p156) target = $region32
    $region31: #{attention_gate_forward.3} parent=5 // pred_region
      %s160 = ssub.s32 %s9, 1
      %p161 = scmp.lt.s32.totalorder %s18, 1
      %s162 = scalar_select %p161, %s18, 1
      %p163 = scmp.lt.s32.totalorder %s19, 0
      %s164 = scalar_select %p163, %s19, 0
      %s165 = sadd.s32 %s164, %s162
      %s166 = smul.addr %s165, 8
      %s167 = scalar_lea.vmem %s0, %s166
      %p168 = pneg %p49
      %p169 = pneg %p46
      %p170 = pneg %p70
      %p171 = pneg %p67
      %p172 = pneg %p91
      %p173 = pneg %p88
      %p174 = pneg %p119
      %p175 = pneg %p116
      %p176 = scmp.lt.s32.totalorder %s18, 1
      %s177 = scalar_select %p176, %s18, 1
      %p178 = scmp.lt.s32.totalorder %s19, 0
      %s179 = scalar_select %p178, %s19, 0
      %s180 = sadd.s32 %s179, %s177
      %s181 = smul.addr %s180, 4
      %s182 = scalar_lea.vmem %s3, %s181
      %p183 = scmp.lt.s32.totalorder %s18, 1
      %s184 = scalar_select %p183, %s18, 1
      %p185 = scmp.lt.s32.totalorder %s19, 0
      %s186 = scalar_select %p185, %s19, 0
      %s187 = sadd.s32 %s186, %s184
      %s188 = smul.addr %s187, 8
      %s189 = scalar_lea.vmem %s0, %s188
      %p190 = scmp.lt.s32.totalorder %s18, 1
      %s191 = scalar_select %p190, %s18, 1
      %p192 = scmp.lt.s32.totalorder %s19, 0
      %s193 = scalar_select %p192, %s19, 0
      %s194 = sadd.s32 %s193, %s191
      %s195 = smul.addr %s194, 4
      %s196 = scalar_lea.vmem %s3, %s195
      %v197 = vld [vmem:[%s1] sm:$0xf]
      %v198 = vld [vmem:[%s189] sm:$0x3f]
      %v199 = vld [vmem:[%s2] sm:$0xf]
      %201 = vset.pattern.permute.xlu0 0
      %202 = vperm.xlu0 %201, %v199
      %v203 = vpop.permute.xlu0 %202
      %vm205 = vcmask 48128
      %v207 = vsel %vm205, %v197, 0
      %vm209 = vcmask 1045504
      %v211 = vsel %vm209, %v198, 0
      %213 = vmatprep.subr.mxu0 0.0
      %214 = vmatpush1.msra.mxu0 %v211
      %215 = vmatprep.subr.mxu0 0.0
      %216 = vmatpush1.msra.mxu0 0.0
      %217 = vmatprep.subr.mxu0 0.0
      %218 = vmatpush1.msra.mxu0 0.0
      %219 = vmatprep.subr.mxu0 0.0
      %220 = vmatpush1.msra.mxu0 0.0
      %221 = vmatprep.subr.mxu0 0.0
      %222 = vmatpush1.msra.mxu0 0.0
      %223 = vmatprep.subr.mxu0 0.0
      %224 = vmatpush1.msra.mxu0 0.0
      %225 = vmatprep.subr.mxu0 0.0
      %226 = vmatpush1.msra.mxu0 0.0
      %227 = vmatprep.subr.mxu0 0.0
      %228 = vmatpush1.msra.mxu0 0.0
      %229 = vmatprep.subr.mxu0 0.0
      %230 = vmatpush1.msra.mxu0 0.0
      %231 = vmatprep.subr.mxu0 0.0
      %232 = vmatpush1.msra.mxu0 0.0
      %233 = vmatprep.subr.mxu0 0.0
      %234 = vmatpush1.msra.mxu0 0.0
      %235 = vmatprep.subr.mxu0 0.0
      %236 = vmatpush1.msra.mxu0 0.0
      %237 = vmatprep.subr.mxu0 0.0
      %238 = vmatpush1.msra.mxu0 0.0
      %239 = vmatprep.subr.mxu0 0.0
      %240 = vmatpush1.msra.mxu0 0.0
      %241 = vmatprep.subr.mxu0 0.0
      %242 = vmatpush1.msra.mxu0 0.0
      %243 = vmatprep.subr.mxu0 0.0
      %244 = vmatpush1.msra.mxu0 0.0
      %245 = vmatprep.subr.mxu0 0.0
      %246 = vmatpush1.msra.mxu0 0.0
      %247 = vmatprep.subr.mxu0 0.0
      %248 = vmatpush1.msra.mxu0 0.0
      %249 = vmatprep.subr.mxu0 0.0
      %250 = vmatpush1.msra.mxu0 0.0
      %251 = vmatprep.subr.mxu0 0.0
      %252 = vmatpush1.msra.mxu0 0.0
      %253 = vmatprep.subr.mxu0 0.0
      %254 = vmatpush1.msra.mxu0 0.0
      %255 = vmatprep.subr.mxu0 0.0
      %256 = vmatpush1.msra.mxu0 0.0
      %257 = vmatprep.subr.mxu0 0.0
      %258 = vmatpush1.msra.mxu0 0.0
      %259 = vmatprep.subr.mxu0 0.0
      %260 = vmatpush1.msra.mxu0 0.0
      %261 = vmatprep.subr.mxu0 0.0
      %262 = vmatpush1.msra.mxu0 0.0
      %263 = vmatprep.subr.mxu0 0.0
      %264 = vmatpush1.msra.mxu0 0.0
      %265 = vmatprep.subr.mxu0 0.0
      %266 = vmatpush1.msra.mxu0 0.0
      %267 = vmatprep.subr.mxu0 0.0
      %268 = vmatpush1.msra.mxu0 0.0
      %269 = vmatprep.subr.mxu0 0.0
      %270 = vmatpush1.msra.mxu0 0.0
      %271 = vmatprep.subr.mxu0 0.0
      %272 = vmatpush1.msra.mxu0 0.0
      %273 = vmatprep.subr.mxu0 0.0
      %274 = vmatpush1.msra.mxu0 0.0
      %275 = vmatprep.subr.mxu0 0.0
      %276 = vmatpush1.msra.mxu0 0.0
      %277 = vmatprep.mubr.f32.mxu0 0.0
      %278 = vmatmul.mubr.f32.gmra.mrb[0].mxu0 %v207
      %v279 = vpop.f32.mrb[0].mxu0
      %v280 = vadd.f32 %v203, %v279
      %v281 = vpop.f32.mrb[0].mxu0
      %282 = vdwg.mxu0
      %vm283 = vcmask 60416
      %284 = vst.msk [vmem:[%s196] sm:$0xf] %vm283, %v280
      %p285 = scmp.lt.s32.totalorder %s18, 1
      %s286 = scalar_select %p285, %s18, 1
      %p287 = scmp.lt.s32.totalorder %s19, 0
      %s288 = scalar_select %p287, %s19, 0
      %s289 = sadd.s32 %s288, %s286
      %s290 = smul.addr %s289, 4
      %s291 = scalar_lea.vmem %s3, %s290
      // Predicated region
      $region33: #{attention_gate_forward.3} parent=31 // pred_check
        %p292 = pneg %p116
      $region34: #{attention_gate_forward.3} parent=31 // pred_check_branch
        %294 = sbr.rel (%p292) target = $region36
      $region35: #{attention_gate_forward.3} parent=31 // pred_region
        _
      $region36: #{attention_gate_forward.3} parent=31 // pred_fallthru
        _
    $region32: #{attention_gate_forward.3} parent=5 // pred_fallthru
      _
    %p295 = scmp.le.s32.totalorder 2, %s9
    // Predicated region
    $region37: #{attention_gate_forward.3} parent=5 // pred_check
      %p296 = pneg %p295
    $region38: #{attention_gate_forward.3} parent=5 // pred_check_branch
      %298 = sbr.rel (%p296) target = $region40
    $region39: #{attention_gate_forward.3} parent=5 // pred_region
      %s299 = ssub.s32 %s9, 2
      // Predicated region
      $region41: #{attention_gate_forward.3} parent=39 // pred_check
        %p300 = pneg %p122
      $region42: #{attention_gate_forward.3} parent=39 // pred_check_branch
        %302 = sbr.rel (%p300) target = $region44
      $region43: #{attention_gate_forward.3} parent=39 // pred_region
        %p303 = scmp.lt.s32.totalorder %s20, 1
        %s304 = scalar_select %p303, %s20, 1
        %p305 = scmp.lt.s32.totalorder %s21, 0
        %s306 = scalar_select %p305, %s21, 0
        %s307 = sadd.s32 %s306, %s304
        %s308 = smul.addr %s307, 4
        %s309 = scalar_lea.vmem %s3, %s308
      $region44: #{attention_gate_forward.3} parent=39 // pred_fallthru
        _
    $region40: #{attention_gate_forward.3} parent=5 // pred_fallthru
      _
  $region6: #{attention_gate_forward.3} parent=0 // loop_footer
    %s13 = sadd.s32 1, %s9
  $region7: #{attention_gate_forward.3} parent=0 // loop_footer_branch
    %8 = sbr.rel target = $region3
  $region8: #{attention_gate_forward.3} parent=0 // loop_exit
    _

// kernel: attention_gate_forward.4
$region0: #{attention_gate_forward.4}
  #allocation0 [shape = 'u32[]', space=smem, size = 0x4, offset = 0x4, fixed_abs, tag = 'smem constant byte address 0x4 - core index']
  #allocation1 [shape = 'u32[144,128]{1,0:T(1,128)}', space=vmem, size = 0x12000, scoped, tag = 'internal scratch']
  #allocation2 [shape = 'f32[1,1]{1,0:T(1,128)S(1)}', space=vmem, size = 0x200, scoped, tag = 'scoped memory for attention_gate_forward.4']
  %s0 = inlined_call_operand.vmem [shape: f32[2,32,64], index: 0, kind: input, shape index: {}]
  %s1 = inlined_call_operand.vmem [shape: f32[2,4,64], index: 1, kind: input, shape index: {}]
  %s2 = inlined_call_operand.vmem [shape: f32[4,32], index: 2, kind: input, shape index: {}]
  %s3 = inlined_call_operand.vmem [shape: f32[4,1], index: 3, kind: input, shape index: {}]
  %s4 = inlined_call_operand.vmem [shape: f32[4,1], index: 4, kind: input, shape index: {}]
  %s5 = inlined_call_operand.<no memory space> [shape: f32[1,1], index: 5, kind: input, shape index: {}]
  %s6 = inlined_call_operand.vmem [shape: f32[2,1,64], index: 6, kind: output, shape index: {}]
  %s7 = sld [smem:[#allocation0]]
  $region57: #{attention_gate_forward.4} parent=0
    _
  %s9 = ssub.s32 1, %s7
  %s10 = scalar_select 0, %s9, %s7
  %v11 = vstv %s5
  %12 = vst [vmem:[#allocation2] sm:$0x1] %v11
  loop: start=0, step=1, limit=4
  $region2: #{attention_gate_forward.4} parent=0 // loop_pre_header
    _
  $region3: #{attention_gate_forward.4} parent=0 // loop_header
    %s14 = sphi 0, %s18
    %p15 = scmp.ge.s32.totalorder %s14, 4
    %s21 = sphi 0, %s33
    %s22 = sphi 0, %s29
    %s23 = sphi 0, %s21
    %s24 = sphi 0, %s22
    %s25 = sphi 0, %s23
    %s26 = sphi 0, %s24
    %s38 = sphi 0, %s40
    %s41 = sphi 0, %s38
    %s42 = sphi 0, %s41
    %s58 = sphi 0, %s42
    %s66 = sphi 0, %s68
    %s69 = sphi 0, %s66
    %s70 = sphi 0, %s69
    %s86 = sphi 0, %s70
    %s90 = sphi 0, %s90
    %s92 = sphi 0, %s90
    %s93 = sphi 0, %s92
    %s107 = sphi 0, %s93
    %s111 = sphi 0, %s111
    %s113 = sphi 0, %s111
    %s114 = sphi 0, %s113
    %s128 = sphi 0, %s114
    %s132 = sphi 0, %s132
    %s134 = sphi 0, %s132
    %s135 = sphi 0, %s134
    %s149 = sphi 0, %s135
    %s153 = sphi 0, %s153
    %s155 = sphi 0, %s153
    %s156 = sphi 0, %s155
    %s170 = sphi 0, %s156
    %s178 = sphi 0, %s180
    %s181 = sphi 0, %s178
    %s182 = sphi 0, %s181
    %s198 = sphi 0, %s182
  $region4: #{attention_gate_forward.4} parent=0 // loop_header_branch
    %17 = sbr.rel (%p15) target = $region8
  $region5: #{attention_gate_forward.4} parent=0 // loop_body
    %s19 = ssub.s32 %s14, 1
    %s20 = ssub.s32 %s14, 2
    %s27 = sadd.s32 1, %s22
    %p28 = scmp.ge.s32.totalorder %s27, 1
    %s29 = scalar_select %p28, 0, %s27
    %s30 = sadd.s32 1, %s21
    %s31 = scalar_select %p28, %s30, %s21
    %p32 = scmp.ge.s32.totalorder %s31, 2
    %s33 = scalar_select %p32, 0, %s31
    %s34 = ssub.s32 %s21, %s33
    %s35 = ssub.s32 %s22, %s29
    %s36 = sor.u32 %s34, %s35
    %p37 = scmp.eq.s32.totalorder %s36, 0
    %s39 = sadd.s32 %s38, 1
    %s40 = scalar_select %p37, %s38, %s39
    %p43 = pneg %p37
    %p44 = scmp.eq.s32.totalorder %s14, 1
    %p45 = por %p43, %p44
    %p46 = scmp.ne.s32.totalorder %s38, %s41
    %p47 = scmp.eq.s32.totalorder %s14, 0
    %p48 = por %p46, %p47
    %p49 = scmp.ne.s32.totalorder %s38, %s41
    %p50 = scmp.eq.s32.totalorder %s19, 1
    %p51 = por %p49, %p50
    %p52 = scmp.ne.s32.totalorder %s41, %s42
    %p53 = scmp.eq.s32.totalorder %s19, 0
    %p54 = por %p52, %p53
    %p55 = scmp.ne.s32.totalorder %s41, %s42
    %p56 = scmp.eq.s32.totalorder %s20, 1
    %p57 = por %p55, %p56
    %p59 = scmp.ne.s32.totalorder %s42, %s58
    %p60 = scmp.eq.s32.totalorder %s20, 0
    %p61 = por %p59, %p60
    %s62 = ssub.s32 %s21, %s33
    %s63 = ssub.s32 %s22, %s29
    %s64 = sor.u32 %s62, %s63
    %p65 = scmp.eq.s32.totalorder %s64, 0
    %s67 = sadd.s32 %s66, 1
    %s68 = scalar_select %p65, %s66, %s67
    %p71 = pneg %p65
    %p72 = scmp.eq.s32.totalorder %s14, 1
    %p73 = por %p71, %p72
    %p74 = scmp.ne.s32.totalorder %s66, %s69
    %p75 = scmp.eq.s32.totalorder %s14, 0
    %p76 = por %p74, %p75
    %p77 = scmp.ne.s32.totalorder %s66, %s69
    %p78 = scmp.eq.s32.totalorder %s19, 1
    %p79 = por %p77, %p78
    %p80 = scmp.ne.s32.totalorder %s69, %s70
    %p81 = scmp.eq.s32.totalorder %s19, 0
    %p82 = por %p80, %p81
    %p83 = scmp.ne.s32.totalorder %s69, %s70
    %p84 = scmp.eq.s32.totalorder %s20, 1
    %p85 = por %p83, %p84
    %p87 = scmp.ne.s32.totalorder %s70, %s86
    %p88 = scmp.eq.s32.totalorder %s20, 0
    %p89 = por %p87, %p88
    %s91 = sadd.s32 %s90, 1
    %p94 = scmp.eq.s32.totalorder %s14, 1
    %p95 = scmp.ne.s32.totalorder %s90, %s92
    %p96 = scmp.eq.s32.totalorder %s14, 0
    %p97 = por %p95, %p96
    %p98 = scmp.ne.s32.totalorder %s90, %s92
    %p99 = scmp.eq.s32.totalorder %s19, 1
    %p100 = por %p98, %p99
    %p101 = scmp.ne.s32.totalorder %s92, %s93
    %p102 = scmp.eq.s32.totalorder %s19, 0
    %p103 = por %p101, %p102
    %p104 = scmp.ne.s32.totalorder %s92, %s93
    %p105 = scmp.eq.s32.totalorder %s20, 1
    %p106 = por %p104, %p105
    %p108 = scmp.ne.s32.totalorder %s93, %s107
    %p109 = scmp.eq.s32.totalorder %s20, 0
    %p110 = por %p108, %p109
    %s112 = sadd.s32 %s111, 1
    %p115 = scmp.eq.s32.totalorder %s14, 1
    %p116 = scmp.ne.s32.totalorder %s111, %s113
    %p117 = scmp.eq.s32.totalorder %s14, 0
    %p118 = por %p116, %p117
    %p119 = scmp.ne.s32.totalorder %s111, %s113
    %p120 = scmp.eq.s32.totalorder %s19, 1
    %p121 = por %p119, %p120
    %p122 = scmp.ne.s32.totalorder %s113, %s114
    %p123 = scmp.eq.s32.totalorder %s19, 0
    %p124 = por %p122, %p123
    %p125 = scmp.ne.s32.totalorder %s113, %s114
    %p126 = scmp.eq.s32.totalorder %s20, 1
    %p127 = por %p125, %p126
    %p129 = scmp.ne.s32.totalorder %s114, %s128
    %p130 = scmp.eq.s32.totalorder %s20, 0
    %p131 = por %p129, %p130
    %s133 = sadd.s32 %s132, 1
    %p136 = scmp.eq.s32.totalorder %s14, 1
    %p137 = scmp.ne.s32.totalorder %s132, %s134
    %p138 = scmp.eq.s32.totalorder %s14, 0
    %p139 = por %p137, %p138
    %p140 = scmp.ne.s32.totalorder %s132, %s134
    %p141 = scmp.eq.s32.totalorder %s19, 1
    %p142 = por %p140, %p141
    %p143 = scmp.ne.s32.totalorder %s134, %s135
    %p144 = scmp.eq.s32.totalorder %s19, 0
    %p145 = por %p143, %p144
    %p146 = scmp.ne.s32.totalorder %s134, %s135
    %p147 = scmp.eq.s32.totalorder %s20, 1
    %p148 = por %p146, %p147
    %p150 = scmp.ne.s32.totalorder %s135, %s149
    %p151 = scmp.eq.s32.totalorder %s20, 0
    %p152 = por %p150, %p151
    %s154 = sadd.s32 %s153, 1
    %p157 = scmp.eq.s32.totalorder %s14, 1
    %p158 = scmp.ne.s32.totalorder %s153, %s155
    %p159 = scmp.eq.s32.totalorder %s14, 0
    %p160 = por %p158, %p159
    %p161 = scmp.ne.s32.totalorder %s153, %s155
    %p162 = scmp.eq.s32.totalorder %s19, 1
    %p163 = por %p161, %p162
    %p164 = scmp.ne.s32.totalorder %s155, %s156
    %p165 = scmp.eq.s32.totalorder %s19, 0
    %p166 = por %p164, %p165
    %p167 = scmp.ne.s32.totalorder %s155, %s156
    %p168 = scmp.eq.s32.totalorder %s20, 1
    %p169 = por %p167, %p168
    %p171 = scmp.ne.s32.totalorder %s156, %s170
    %p172 = scmp.eq.s32.totalorder %s20, 0
    %p173 = por %p171, %p172
    %s174 = ssub.s32 %s21, %s33
    %s175 = ssub.s32 %s22, %s29
    %s176 = sor.u32 %s174, %s175
    %p177 = scmp.eq.s32.totalorder %s176, 0
    %s179 = sadd.s32 %s178, 1
    %s180 = scalar_select %p177, %s178, %s179
    %p183 = pneg %p177
    %p184 = scmp.eq.s32.totalorder %s14, 1
    %p185 = por %p183, %p184
    %p186 = scmp.ne.s32.totalorder %s178, %s181
    %p187 = scmp.eq.s32.totalorder %s14, 0
    %p188 = por %p186, %p187
    %p189 = scmp.ne.s32.totalorder %s178, %s181
    %p190 = scmp.eq.s32.totalorder %s19, 1
    %p191 = por %p189, %p190
    %p192 = scmp.ne.s32.totalorder %s181, %s182
    %p193 = scmp.eq.s32.totalorder %s19, 0
    %p194 = por %p192, %p193
    %p195 = scmp.ne.s32.totalorder %s181, %s182
    %p196 = scmp.eq.s32.totalorder %s20, 1
    %p197 = por %p195, %p196
    %p199 = scmp.ne.s32.totalorder %s182, %s198
    %p200 = scmp.eq.s32.totalorder %s20, 0
    %p201 = por %p199, %p200
    %p202 = scmp.le.s32.totalorder 1, %s14
    %p203 = scmp.lt.s32.totalorder %s14, 3
    %p204 = pnand %p202, %p203
    %p205 = pneg %p204
    // Predicated region
    $region9: #{attention_gate_forward.4} parent=5 // pred_check
      _
    $region10: #{attention_gate_forward.4} parent=5 // pred_check_branch
      %207 = sbr.rel (%p204) target = $region12
    $region11: #{attention_gate_forward.4} parent=5 // pred_region
      %s208 = ssub.s32 %s14, 1
      // Predicated region
      $region13: #{attention_gate_forward.4} parent=11 // pred_check
        %p209 = pneg %p103
      $region14: #{attention_gate_forward.4} parent=11 // pred_check_branch
        %211 = sbr.rel (%p209) target = $region16
      $region15: #{attention_gate_forward.4} parent=11 // pred_region
        _
      $region16: #{attention_gate_forward.4} parent=11 // pred_fallthru
        _
      // Predicated region
      $region17: #{attention_gate_forward.4} parent=11 // pred_check
        %p212 = pneg %p124
      $region18: #{attention_gate_forward.4} parent=11 // pred_check_branch
        %214 = sbr.rel (%p212) target = $region20
      $region19: #{attention_gate_forward.4} parent=11 // pred_region
        _
      $region20: #{attention_gate_forward.4} parent=11 // pred_fallthru
        _
      // Predicated region
      $region21: #{attention_gate_forward.4} parent=11 // pred_check
        %p215 = pneg %p145
      $region22: #{attention_gate_forward.4} parent=11 // pred_check_branch
        %217 = sbr.rel (%p215) target = $region24
      $region23: #{attention_gate_forward.4} parent=11 // pred_region
        _
      $region24: #{attention_gate_forward.4} parent=11 // pred_fallthru
        _
      // Predicated region
      $region25: #{attention_gate_forward.4} parent=11 // pred_check
        %p218 = pneg %p166
      $region26: #{attention_gate_forward.4} parent=11 // pred_check_branch
        %220 = sbr.rel (%p218) target = $region28
      $region27: #{attention_gate_forward.4} parent=11 // pred_region
        _
      $region28: #{attention_gate_forward.4} parent=11 // pred_fallthru
        _
    $region12: #{attention_gate_forward.4} parent=5 // pred_fallthru
      _
    %p221 = scmp.lt.s32.totalorder %s14, 2
    // Predicated region
    $region29: #{attention_gate_forward.4} parent=5 // pred_check
      %p222 = pneg %p221
    $region30: #{attention_gate_forward.4} parent=5 // pred_check_branch
      %224 = sbr.rel (%p222) target = $region32
    $region31: #{attention_gate_forward.4} parent=5 // pred_region
      // Predicated region
      $region33: #{attention_gate_forward.4} parent=31 // pred_check
        %p225 = pneg %p48
      $region34: #{attention_gate_forward.4} parent=31 // pred_check_branch
        %227 = sbr.rel (%p225) target = $region36
      $region35: #{attention_gate_forward.4} parent=31 // pred_region
        %p228 = scmp.lt.s32.totalorder %s21, 1
        %s229 = scalar_select %p228, %s21, 1
        %p230 = scmp.lt.s32.totalorder %s22, 0
        %s231 = scalar_select %p230, %s22, 0
        %s232 = smul.addr %s229, 4
        %s233 = sadd.s32 %s231, %s232
        %s234 = smul.addr %s233, 8
        %s235 = scalar_lea.vmem %s0, %s234
      $region36: #{attention_gate_forward.4} parent=31 // pred_fallthru
        _
      // Predicated region
      $region37: #{attention_gate_forward.4} parent=31 // pred_check
        %p236 = pneg %p76
      $region38: #{attention_gate_forward.4} parent=31 // pred_check_branch
        %238 = sbr.rel (%p236) target = $region40
      $region39: #{attention_gate_forward.4} parent=31 // pred_region
        %p239 = scmp.lt.s32.totalorder %s21, 1
        %s240 = scalar_select %p239, %s21, 1
        %p241 = scmp.lt.s32.totalorder %s22, 0
        %s242 = scalar_select %p241, %s22, 0
        %s243 = sadd.s32 %s242, %s240
        %s244 = smul.addr %s243, 4
        %s245 = scalar_lea.vmem %s1, %s244
      $region40: #{attention_gate_forward.4} parent=31 // pred_fallthru
        _
    $region32: #{attention_gate_forward.4} parent=5 // pred_fallthru
      _
    %p246 = scmp.le.s32.totalorder 1, %s14
    %p247 = scmp.lt.s32.totalorder %s14, 3
    %p248 = pnand %p246, %p247
    %p249 = pneg %p248
    // Predicated region
    $region41: #{attention_gate_forward.4} parent=5 // pred_check
      _
    $region42: #{attention_gate_forward.4} parent=5 // pred_check_branch
      %251 = sbr.rel (%p248) target = $region44
    $region43: #{attention_gate_forward.4} parent=5 // pred_region
      %s252 = ssub.s32 %s14, 1
      %p253 = scmp.lt.s32.totalorder %s23, 1
      %s254 = scalar_select %p253, %s23, 1
      %p255 = scmp.lt.s32.totalorder %s24, 0
      %s256 = scalar_select %p255, %s24, 0
      %s257 = smul.addr %s254, 4
      %s258 = sadd.s32 %s256, %s257
      %s259 = smul.addr %s258, 8
      %s260 = scalar_lea.vmem %s0, %s259
      %p261 = pneg %p54
      %p262 = pneg %p51
      %p263 = scmp.lt.s32.totalorder %s23, 1
      %s264 = scalar_select %p263, %s23, 1
      %p265 = scmp.lt.s32.totalorder %s24, 0
      %s266 = scalar_select %p265, %s24, 0
      %s267 = sadd.s32 %s266, %s264
      %s268 = smul.addr %s267, 4
      %s269 = scalar_lea.vmem %s1, %s268
      %p270 = pneg %p82
      %p271 = pneg %p79
      %p272 = pneg %p103
      %p273 = pneg %p100
      %p274 = pneg %p124
      %p275 = pneg %p121
      %p276 = pneg %p145
      %p277 = pneg %p142
      %p278 = pneg %p166
      %p279 = pneg %p163
      %p280 = pneg %p194
      %p281 = pneg %p191
      %p282 = scmp.lt.s32.totalorder %s23, 1
      %s283 = scalar_select %p282, %s23, 1
      %p284 = scmp.lt.s32.totalorder %s24, 0
      %s285 = scalar_select %p284, %s24, 0
      %s286 = sadd.s32 %s285, %s283
      %s287 = scalar_lea.vmem %s6, %s286
      %p288 = scmp.lt.s32.totalorder %s23, 1
      %s289 = scalar_select %p288, %s23, 1
      %p290 = scmp.lt.s32.totalorder %s24, 0
      %s291 = scalar_select %p290, %s24, 0
      %s292 = smul.addr %s289, 4
      %s293 = sadd.s32 %s291, %s292
      %s294 = smul.addr %s293, 8
      %s295 = scalar_lea.vmem %s0, %s294
      %p296 = scmp.lt.s32.totalorder %s23, 1
      %s297 = scalar_select %p296, %s23, 1
      %p298 = scmp.lt.s32.totalorder %s24, 0
      %s299 = scalar_select %p298, %s24, 0
      %s300 = sadd.s32 %s299, %s297
      %s301 = smul.addr %s300, 4
      %s302 = scalar_lea.vmem %s1, %s301
      %p303 = scmp.lt.s32.totalorder %s23, 1
      %s304 = scalar_select %p303, %s23, 1
      %p305 = scmp.lt.s32.totalorder %s24, 0
      %s306 = scalar_select %p305, %s24, 0
      %s307 = sadd.s32 %s306, %s304
      %s308 = scalar_lea.vmem %s6, %s307
      %v309 = vld [vmem:[%s2] sm:$0xf]
      %v310 = vld [vmem:[%s295] sm:$0xff]
      %v311 = vld [vmem:[%s295 + $0x8] sm:$0xff]
      %v312 = vld [vmem:[%s295 + $0x10] sm:$0xff]
      %v313 = vld [vmem:[%s295 + $0x18] sm:$0xff]
      %v314 = vld [vmem:[%s3] sm:$0xf]
      %316 = vset.pattern.permute.xlu0 0
      %317 = vperm.xlu0 %316, %v314
      %v318 = vpop.permute.xlu0 %317
      %vm320 = vcmask 261120
      %v322 = vsel %vm320, %v309, 0
      %324 = vmatprep.subr.mxu0 0.0
      %325 = vmatpush1.msra.mxu0 %v310
      %326 = vmatprep.subr.mxu0 0.0
      %327 = vmatpush1.msra.mxu0 %v311
      %328 = vmatprep.subr.mxu0 0.0
      %329 = vmatpush1.msra.mxu0 %v312
      %330 = vmatprep.subr.mxu0 0.0
      %331 = vmatpush1.msra.mxu0 %v313
      %332 = vmatprep.subr.mxu0 0.0
      %333 = vmatpush1.msra.mxu0 0.0
      %334 = vmatprep.subr.mxu0 0.0
      %335 = vmatpush1.msra.mxu0 0.0
      %336 = vmatprep.subr.mxu0 0.0
      %337 = vmatpush1.msra.mxu0 0.0
      %338 = vmatprep.subr.mxu0 0.0
      %339 = vmatpush1.msra.mxu0 0.0
      %340 = vmatprep.subr.mxu0 0.0
      %341 = vmatpush1.msra.mxu0 0.0
      %342 = vmatprep.subr.mxu0 0.0
      %343 = vmatpush1.msra.mxu0 0.0
      %344 = vmatprep.subr.mxu0 0.0
      %345 = vmatpush1.msra.mxu0 0.0
      %346 = vmatprep.subr.mxu0 0.0
      %347 = vmatpush1.msra.mxu0 0.0
      %348 = vmatprep.subr.mxu0 0.0
      %349 = vmatpush1.msra.mxu0 0.0
      %350 = vmatprep.subr.mxu0 0.0
      %351 = vmatpush1.msra.mxu0 0.0
      %352 = vmatprep.subr.mxu0 0.0
      %353 = vmatpush1.msra.mxu0 0.0
      %354 = vmatprep.subr.mxu0 0.0
      %355 = vmatpush1.msra.mxu0 0.0
      %356 = vmatprep.subr.mxu0 0.0
      %357 = vmatpush1.msra.mxu0 0.0
      %358 = vmatprep.subr.mxu0 0.0
      %359 = vmatpush1.msra.mxu0 0.0
      %360 = vmatprep.subr.mxu0 0.0
      %361 = vmatpush1.msra.mxu0 0.0
      %362 = vmatprep.subr.mxu0 0.0
      %363 = vmatpush1.msra.mxu0 0.0
      %364 = vmatprep.subr.mxu0 0.0
      %365 = vmatpush1.msra.mxu0 0.0
      %366 = vmatprep.subr.mxu0 0.0
      %367 = vmatpush1.msra.mxu0 0.0
      %368 = vmatprep.subr.mxu0 0.0
      %369 = vmatpush1.msra.mxu0 0.0
      %370 = vmatprep.subr.mxu0 0.0
      %371 = vmatpush1.msra.mxu0 0.0
      %372 = vmatprep.subr.mxu0 0.0
      %373 = vmatpush1.msra.mxu0 0.0
      %374 = vmatprep.subr.mxu0 0.0
      %375 = vmatpush1.msra.mxu0 0.0
      %376 = vmatprep.subr.mxu0 0.0
      %377 = vmatpush1.msra.mxu0 0.0
      %378 = vmatprep.subr.mxu0 0.0
      %379 = vmatpush1.msra.mxu0 0.0
      %380 = vmatprep.subr.mxu0 0.0
      %381 = vmatpush1.msra.mxu0 0.0
      %382 = vmatprep.subr.mxu0 0.0
      %383 = vmatpush1.msra.mxu0 0.0
      %384 = vmatprep.subr.mxu0 0.0
      %385 = vmatpush1.msra.mxu0 0.0
      %386 = vmatprep.subr.mxu0 0.0
      %387 = vmatpush1.msra.mxu0 0.0
      %388 = vmatprep.mubr.f32.mxu0 0.0
      %389 = vmatmul.mubr.f32.gmra.mrb[0].mxu0 %v322
      %v390 = vpop.f32.mrb[0].mxu0
      %v391 = vadd.f32 %v318, %v390
      %v392 = vpop.f32.mrb[0].mxu0
      %393 = vdwg.mxu0
      %v394 = vld [vmem:[%s302] sm:$0xf]
      %v395 = vadd.f32 %v391, %v394
      %v396 = vmax.f32 %v395, 0.0
      %v397 = vld [vmem:[%s4] sm:$0xf]
      %399 = vset.pattern.permute.xlu0 0
      %400 = vperm.xlu0 %399, %v397
      %v401 = vpop.permute.xlu0 %400
      %v403 = vmul.f32 %v396, %v401
      %vm404 = vcmask 519168
      %v405 = vsel %vm404, %v403, 0.0
      %v406 = vrot.slane %v405, 4
      %v407 = vadd.f32 %v405, %v406
      %v408 = vrot.slane %v407, 2
      %v409 = vadd.f32 %v407, %v408
      %v410 = vrot.slane %v409, 1
      %v411 = vadd.f32 %v409, %v410
      %v412 = vld [vmem:[#allocation2] sm:$0x1]
      %414 = vset.pattern.permute.xlu0 0
      %415 = vperm.xlu0 %414, %v412
      %v416 = vpop.permute.xlu0 %415
      %v418 = vlaneseq
      %v419 = vshrl.u32 %v418, 7
      %v420 = vsub.s32 0, %v419
      %v421 = vrot.slane %v416, %v420
      %v422 = vadd.f32 %v411, %v421
      %v423 = vxor.u32 %v422, 2147483648
      %v424 = vmul.f32 %v423, 1.442695
      %v425 = vpow.pop %v424
      %v426 = vadd.f32 %v425, 1.0
      %v427 = vrcp.pop %v426
      %v428 = vmul.f32 1.0, %v427
      %vm429 = vcmask 516096
      %430 = vst.msk [vmem:[%s308] sm:$0x1] %vm429, %v428
      %p431 = scmp.lt.s32.totalorder %s23, 1
      %s432 = scalar_select %p431, %s23, 1
      %p433 = scmp.lt.s32.totalorder %s24, 0
      %s434 = scalar_select %p433, %s24, 0
      %s435 = sadd.s32 %s434, %s432
      %s436 = scalar_lea.vmem %s6, %s435
      // Predicated region
      $region45: #{attention_gate_forward.4} parent=43 // pred_check
        %p437 = pneg %p191
      $region46: #{attention_gate_forward.4} parent=43 // pred_check_branch
        %439 = sbr.rel (%p437) target = $region48
      $region47: #{attention_gate_forward.4} parent=43 // pred_region
        _
      $region48: #{attention_gate_forward.4} parent=43 // pred_fallthru
        _
    $region44: #{attention_gate_forward.4} parent=5 // pred_fallthru
      _
    %p440 = scmp.le.s32.totalorder 2, %s14
    // Predicated region
    $region49: #{attention_gate_forward.4} parent=5 // pred_check
      %p441 = pneg %p440
    $region50: #{attention_gate_forward.4} parent=5 // pred_check_branch
      %443 = sbr.rel (%p441) target = $region52
    $region51: #{attention_gate_forward.4} parent=5 // pred_region
      %s444 = ssub.s32 %s14, 2
      // Predicated region
      $region53: #{attention_gate_forward.4} parent=51 // pred_check
        %p445 = pneg %p197
      $region54: #{attention_gate_forward.4} parent=51 // pred_check_branch
        %447 = sbr.rel (%p445) target = $region56
      $region55: #{attention_gate_forward.4} parent=51 // pred_region
        %p448 = scmp.lt.s32.totalorder %s25, 1
        %s449 = scalar_select %p448, %s25, 1
        %p450 = scmp.lt.s32.totalorder %s26, 0
        %s451 = scalar_select %p450, %s26, 0
        %s452 = sadd.s32 %s451, %s449
        %s453 = scalar_lea.vmem %s6, %s452
      $region56: #{attention_gate_forward.4} parent=51 // pred_fallthru
        _
    $region52: #{attention_gate_forward.4} parent=5 // pred_fallthru
      _
  $region6: #{attention_gate_forward.4} parent=0 // loop_footer
    %s18 = sadd.s32 1, %s14
  $region7: #{attention_gate_forward.4} parent=0 // loop_footer_branch
    %13 = sbr.rel target = $region3
  $region8: #{attention_gate_forward.4} parent=0 // loop_exit
    _

// kernel: attention_gate_forward.5
$region0: #{attention_gate_forward.5}
  #allocation0 [shape = 'u32[]', space=smem, size = 0x4, offset = 0x4, fixed_abs, tag = 'smem constant byte address 0x4 - core index']
  #allocation1 [shape = 'u32[144,128]{1,0:T(1,128)}', space=vmem, size = 0x12000, scoped, tag = 'internal scratch']
  %s0 = inlined_call_operand.vmem [shape: f32[2,4,512], index: 0, kind: input, shape index: {}]
  %s1 = inlined_call_operand.vmem [shape: f32[2,1,512], index: 1, kind: input, shape index: {}]
  %s2 = inlined_call_operand.vmem [shape: f32[4,4], index: 2, kind: input, shape index: {}]
  %s3 = inlined_call_operand.vmem [shape: f32[4,1], index: 3, kind: input, shape index: {}]
  %s4 = inlined_call_operand.vmem [shape: f32[2,4,512], index: 4, kind: output, shape index: {0}]
  %s5 = inlined_call_operand.vmem [shape: f32[2,1,4,1], index: 5, kind: output, shape index: {1}]
  %s6 = inlined_call_operand.vmem [shape: f32[2,1,4,1], index: 6, kind: output, shape index: {2}]
  %7 = xla_tuple %s4, %s5, %s6
  %s8 = sld [smem:[#allocation0]]
  $region65: #{attention_gate_forward.5} parent=0
    _
  %s10 = ssub.s32 1, %s8
  %s11 = scalar_select 0, %s10, %s8
  loop: start=0, step=1, limit=4
  $region2: #{attention_gate_forward.5} parent=0 // loop_pre_header
    _
  $region3: #{attention_gate_forward.5} parent=0 // loop_header
    %s13 = sphi 0, %s17
    %p14 = scmp.ge.s32.totalorder %s13, 4
    %s20 = sphi 0, %s32
    %s21 = sphi 0, %s28
    %s22 = sphi 0, %s20
    %s23 = sphi 0, %s21
    %s24 = sphi 0, %s22
    %s25 = sphi 0, %s23
    %s37 = sphi 0, %s39
    %s40 = sphi 0, %s37
    %s41 = sphi 0, %s40
    %s57 = sphi 0, %s41
    %s65 = sphi 0, %s67
    %s68 = sphi 0, %s65
    %s69 = sphi 0, %s68
    %s85 = sphi 0, %s69
    %s89 = sphi 0, %s89
    %s91 = sphi 0, %s89
    %s92 = sphi 0, %s91
    %s106 = sphi 0, %s92
    %s110 = sphi 0, %s110
    %s112 = sphi 0, %s110
    %s113 = sphi 0, %s112
    %s127 = sphi 0, %s113
    %s135 = sphi 0, %s137
    %s138 = sphi 0, %s135
    %s139 = sphi 0, %s138
    %s155 = sphi 0, %s139
    %s163 = sphi 0, %s165
    %s166 = sphi 0, %s163
    %s167 = sphi 0, %s166
    %s183 = sphi 0, %s167
    %s191 = sphi 0, %s193
    %s194 = sphi 0, %s191
    %s195 = sphi 0, %s194
    %s211 = sphi 0, %s195
  $region4: #{attention_gate_forward.5} parent=0 // loop_header_branch
    %16 = sbr.rel (%p14) target = $region8
  $region5: #{attention_gate_forward.5} parent=0 // loop_body
    %s18 = ssub.s32 %s13, 1
    %s19 = ssub.s32 %s13, 2
    %s26 = sadd.s32 1, %s21
    %p27 = scmp.ge.s32.totalorder %s26, 1
    %s28 = scalar_select %p27, 0, %s26
    %s29 = sadd.s32 1, %s20
    %s30 = scalar_select %p27, %s29, %s20
    %p31 = scmp.ge.s32.totalorder %s30, 2
    %s32 = scalar_select %p31, 0, %s30
    %s33 = ssub.s32 %s20, %s32
    %s34 = ssub.s32 %s21, %s28
    %s35 = sor.u32 %s33, %s34
    %p36 = scmp.eq.s32.totalorder %s35, 0
    %s38 = sadd.s32 %s37, 1
    %s39 = scalar_select %p36, %s37, %s38
    %p42 = pneg %p36
    %p43 = scmp.eq.s32.totalorder %s13, 1
    %p44 = por %p42, %p43
    %p45 = scmp.ne.s32.totalorder %s37, %s40
    %p46 = scmp.eq.s32.totalorder %s13, 0
    %p47 = por %p45, %p46
    %p48 = scmp.ne.s32.totalorder %s37, %s40
    %p49 = scmp.eq.s32.totalorder %s18, 1
    %p50 = por %p48, %p49
    %p51 = scmp.ne.s32.totalorder %s40, %s41
    %p52 = scmp.eq.s32.totalorder %s18, 0
    %p53 = por %p51, %p52
    %p54 = scmp.ne.s32.totalorder %s40, %s41
    %p55 = scmp.eq.s32.totalorder %s19, 1
    %p56 = por %p54, %p55
    %p58 = scmp.ne.s32.totalorder %s41, %s57
    %p59 = scmp.eq.s32.totalorder %s19, 0
    %p60 = por %p58, %p59
    %s61 = ssub.s32 %s20, %s32
    %s62 = ssub.s32 %s21, %s28
    %s63 = sor.u32 %s61, %s62
    %p64 = scmp.eq.s32.totalorder %s63, 0
    %s66 = sadd.s32 %s65, 1
    %s67 = scalar_select %p64, %s65, %s66
    %p70 = pneg %p64
    %p71 = scmp.eq.s32.totalorder %s13, 1
    %p72 = por %p70, %p71
    %p73 = scmp.ne.s32.totalorder %s65, %s68
    %p74 = scmp.eq.s32.totalorder %s13, 0
    %p75 = por %p73, %p74
    %p76 = scmp.ne.s32.totalorder %s65, %s68
    %p77 = scmp.eq.s32.totalorder %s18, 1
    %p78 = por %p76, %p77
    %p79 = scmp.ne.s32.totalorder %s68, %s69
    %p80 = scmp.eq.s32.totalorder %s18, 0
    %p81 = por %p79, %p80
    %p82 = scmp.ne.s32.totalorder %s68, %s69
    %p83 = scmp.eq.s32.totalorder %s19, 1
    %p84 = por %p82, %p83
    %p86 = scmp.ne.s32.totalorder %s69, %s85
    %p87 = scmp.eq.s32.totalorder %s19, 0
    %p88 = por %p86, %p87
    %s90 = sadd.s32 %s89, 1
    %p93 = scmp.eq.s32.totalorder %s13, 1
    %p94 = scmp.ne.s32.totalorder %s89, %s91
    %p95 = scmp.eq.s32.totalorder %s13, 0
    %p96 = por %p94, %p95
    %p97 = scmp.ne.s32.totalorder %s89, %s91
    %p98 = scmp.eq.s32.totalorder %s18, 1
    %p99 = por %p97, %p98
    %p100 = scmp.ne.s32.totalorder %s91, %s92
    %p101 = scmp.eq.s32.totalorder %s18, 0
    %p102 = por %p100, %p101
    %p103 = scmp.ne.s32.totalorder %s91, %s92
    %p104 = scmp.eq.s32.totalorder %s19, 1
    %p105 = por %p103, %p104
    %p107 = scmp.ne.s32.totalorder %s92, %s106
    %p108 = scmp.eq.s32.totalorder %s19, 0
    %p109 = por %p107, %p108
    %s111 = sadd.s32 %s110, 1
    %p114 = scmp.eq.s32.totalorder %s13, 1
    %p115 = scmp.ne.s32.totalorder %s110, %s112
    %p116 = scmp.eq.s32.totalorder %s13, 0
    %p117 = por %p115, %p116
    %p118 = scmp.ne.s32.totalorder %s110, %s112
    %p119 = scmp.eq.s32.totalorder %s18, 1
    %p120 = por %p118, %p119
    %p121 = scmp.ne.s32.totalorder %s112, %s113
    %p122 = scmp.eq.s32.totalorder %s18, 0
    %p123 = por %p121, %p122
    %p124 = scmp.ne.s32.totalorder %s112, %s113
    %p125 = scmp.eq.s32.totalorder %s19, 1
    %p126 = por %p124, %p125
    %p128 = scmp.ne.s32.totalorder %s113, %s127
    %p129 = scmp.eq.s32.totalorder %s19, 0
    %p130 = por %p128, %p129
    %s131 = ssub.s32 %s20, %s32
    %s132 = ssub.s32 %s21, %s28
    %s133 = sor.u32 %s131, %s132
    %p134 = scmp.eq.s32.totalorder %s133, 0
    %s136 = sadd.s32 %s135, 1
    %s137 = scalar_select %p134, %s135, %s136
    %p140 = pneg %p134
    %p141 = scmp.eq.s32.totalorder %s13, 1
    %p142 = por %p140, %p141
    %p143 = scmp.ne.s32.totalorder %s135, %s138
    %p144 = scmp.eq.s32.totalorder %s13, 0
    %p145 = por %p143, %p144
    %p146 = scmp.ne.s32.totalorder %s135, %s138
    %p147 = scmp.eq.s32.totalorder %s18, 1
    %p148 = por %p146, %p147
    %p149 = scmp.ne.s32.totalorder %s138, %s139
    %p150 = scmp.eq.s32.totalorder %s18, 0
    %p151 = por %p149, %p150
    %p152 = scmp.ne.s32.totalorder %s138, %s139
    %p153 = scmp.eq.s32.totalorder %s19, 1
    %p154 = por %p152, %p153
    %p156 = scmp.ne.s32.totalorder %s139, %s155
    %p157 = scmp.eq.s32.totalorder %s19, 0
    %p158 = por %p156, %p157
    %s159 = ssub.s32 %s20, %s32
    %s160 = ssub.s32 %s21, %s28
    %s161 = sor.u32 %s159, %s160
    %p162 = scmp.eq.s32.totalorder %s161, 0
    %s164 = sadd.s32 %s163, 1
    %s165 = scalar_select %p162, %s163, %s164
    %p168 = pneg %p162
    %p169 = scmp.eq.s32.totalorder %s13, 1
    %p170 = por %p168, %p169
    %p171 = scmp.ne.s32.totalorder %s163, %s166
    %p172 = scmp.eq.s32.totalorder %s13, 0
    %p173 = por %p171, %p172
    %p174 = scmp.ne.s32.totalorder %s163, %s166
    %p175 = scmp.eq.s32.totalorder %s18, 1
    %p176 = por %p174, %p175
    %p177 = scmp.ne.s32.totalorder %s166, %s167
    %p178 = scmp.eq.s32.totalorder %s18, 0
    %p179 = por %p177, %p178
    %p180 = scmp.ne.s32.totalorder %s166, %s167
    %p181 = scmp.eq.s32.totalorder %s19, 1
    %p182 = por %p180, %p181
    %p184 = scmp.ne.s32.totalorder %s167, %s183
    %p185 = scmp.eq.s32.totalorder %s19, 0
    %p186 = por %p184, %p185
    %s187 = ssub.s32 %s20, %s32
    %s188 = ssub.s32 %s21, %s28
    %s189 = sor.u32 %s187, %s188
    %p190 = scmp.eq.s32.totalorder %s189, 0
    %s192 = sadd.s32 %s191, 1
    %s193 = scalar_select %p190, %s191, %s192
    %p196 = pneg %p190
    %p197 = scmp.eq.s32.totalorder %s13, 1
    %p198 = por %p196, %p197
    %p199 = scmp.ne.s32.totalorder %s191, %s194
    %p200 = scmp.eq.s32.totalorder %s13, 0
    %p201 = por %p199, %p200
    %p202 = scmp.ne.s32.totalorder %s191, %s194
    %p203 = scmp.eq.s32.totalorder %s18, 1
    %p204 = por %p202, %p203
    %p205 = scmp.ne.s32.totalorder %s194, %s195
    %p206 = scmp.eq.s32.totalorder %s18, 0
    %p207 = por %p205, %p206
    %p208 = scmp.ne.s32.totalorder %s194, %s195
    %p209 = scmp.eq.s32.totalorder %s19, 1
    %p210 = por %p208, %p209
    %p212 = scmp.ne.s32.totalorder %s195, %s211
    %p213 = scmp.eq.s32.totalorder %s19, 0
    %p214 = por %p212, %p213
    %p215 = scmp.le.s32.totalorder 1, %s13
    %p216 = scmp.lt.s32.totalorder %s13, 3
    %p217 = pnand %p215, %p216
    %p218 = pneg %p217
    // Predicated region
    $region9: #{attention_gate_forward.5} parent=5 // pred_check
      _
    $region10: #{attention_gate_forward.5} parent=5 // pred_check_branch
      %220 = sbr.rel (%p217) target = $region12
    $region11: #{attention_gate_forward.5} parent=5 // pred_region
      %s221 = ssub.s32 %s13, 1
      // Predicated region
      $region13: #{attention_gate_forward.5} parent=11 // pred_check
        %p222 = pneg %p102
      $region14: #{attention_gate_forward.5} parent=11 // pred_check_branch
        %224 = sbr.rel (%p222) target = $region16
      $region15: #{attention_gate_forward.5} parent=11 // pred_region
        _
      $region16: #{attention_gate_forward.5} parent=11 // pred_fallthru
        _
      // Predicated region
      $region17: #{attention_gate_forward.5} parent=11 // pred_check
        %p225 = pneg %p123
      $region18: #{attention_gate_forward.5} parent=11 // pred_check_branch
        %227 = sbr.rel (%p225) target = $region20
      $region19: #{attention_gate_forward.5} parent=11 // pred_region
        _
      $region20: #{attention_gate_forward.5} parent=11 // pred_fallthru
        _
    $region12: #{attention_gate_forward.5} parent=5 // pred_fallthru
      _
    %p228 = scmp.lt.s32.totalorder %s13, 2
    // Predicated region
    $region21: #{attention_gate_forward.5} parent=5 // pred_check
      %p229 = pneg %p228
    $region22: #{attention_gate_forward.5} parent=5 // pred_check_branch
      %231 = sbr.rel (%p229) target = $region24
    $region23: #{attention_gate_forward.5} parent=5 // pred_region
      // Predicated region
      $region25: #{attention_gate_forward.5} parent=23 // pred_check
        %p232 = pneg %p47
      $region26: #{attention_gate_forward.5} parent=23 // pred_check_branch
        %234 = sbr.rel (%p232) target = $region28
      $region27: #{attention_gate_forward.5} parent=23 // pred_region
        %s235 = smul.u32 4, %s21
        %p236 = scmp.lt.s32.totalorder %s20, 1
        %s237 = scalar_select %p236, %s20, 1
        %p238 = scmp.lt.s32.totalorder %s235, 3
        %s239 = scalar_select %p238, %s235, 3
        %s240 = smul.addr %s237, 4
        %s241 = sadd.s32 %s239, %s240
        %s242 = smul.addr %s241, 4
        %s243 = scalar_lea.vmem %s0, %s242
        %s244 = smul.u32 4, %s21
      $region28: #{attention_gate_forward.5} parent=23 // pred_fallthru
        _
      // Predicated region
      $region29: #{attention_gate_forward.5} parent=23 // pred_check
        %p245 = pneg %p75
      $region30: #{attention_gate_forward.5} parent=23 // pred_check_branch
        %247 = sbr.rel (%p245) target = $region32
      $region31: #{attention_gate_forward.5} parent=23 // pred_region
        %s248 = smul.u32 4, %s21
        %p249 = scmp.lt.s32.totalorder %s20, 1
        %s250 = scalar_select %p249, %s20, 1
        %p251 = scmp.lt.s32.totalorder %s248, 3
        %s252 = scalar_select %p251, %s248, 3
        %s253 = smul.addr %s250, 4
        %s254 = sadd.s32 %s252, %s253
        %s255 = scalar_lea.vmem %s1, %s254
        %s256 = smul.u32 4, %s21
      $region32: #{attention_gate_forward.5} parent=23 // pred_fallthru
        _
    $region24: #{attention_gate_forward.5} parent=5 // pred_fallthru
      _
    %p257 = scmp.le.s32.totalorder 1, %s13
    %p258 = scmp.lt.s32.totalorder %s13, 3
    %p259 = pnand %p257, %p258
    %p260 = pneg %p259
    // Predicated region
    $region33: #{attention_gate_forward.5} parent=5 // pred_check
      _
    $region34: #{attention_gate_forward.5} parent=5 // pred_check_branch
      %262 = sbr.rel (%p259) target = $region36
    $region35: #{attention_gate_forward.5} parent=5 // pred_region
      %s263 = ssub.s32 %s13, 1
      %s264 = smul.u32 4, %s23
      %p265 = scmp.lt.s32.totalorder %s22, 1
      %s266 = scalar_select %p265, %s22, 1
      %p267 = scmp.lt.s32.totalorder %s264, 3
      %s268 = scalar_select %p267, %s264, 3
      %s269 = smul.addr %s266, 4
      %s270 = sadd.s32 %s268, %s269
      %s271 = smul.addr %s270, 4
      %s272 = scalar_lea.vmem %s0, %s271
      %p273 = pneg %p53
      %p274 = pneg %p50
      %s275 = smul.u32 4, %s23
      %p276 = scmp.lt.s32.totalorder %s22, 1
      %s277 = scalar_select %p276, %s22, 1
      %p278 = scmp.lt.s32.totalorder %s275, 3
      %s279 = scalar_select %p278, %s275, 3
      %s280 = smul.addr %s277, 4
      %s281 = sadd.s32 %s279, %s280
      %s282 = scalar_lea.vmem %s1, %s281
      %p283 = pneg %p81
      %p284 = pneg %p78
      %p285 = pneg %p102
      %p286 = pneg %p99
      %p287 = pneg %p123
      %p288 = pneg %p120
      %p289 = pneg %p151
      %p290 = pneg %p148
      %s291 = smul.u32 4, %s23
      %p292 = scmp.lt.s32.totalorder %s22, 1
      %s293 = scalar_select %p292, %s22, 1
      %p294 = scmp.lt.s32.totalorder %s291, 3
      %s295 = scalar_select %p294, %s291, 3
      %s296 = smul.addr %s293, 4
      %s297 = sadd.s32 %s295, %s296
      %s298 = smul.addr %s297, 4
      %s299 = scalar_lea.vmem %s4, %s298
      %p300 = pneg %p179
      %p301 = pneg %p176
      %p302 = scmp.lt.s32.totalorder %s22, 1
      %s303 = scalar_select %p302, %s22, 1
      %p304 = scmp.lt.s32.totalorder %s23, 0
      %s305 = scalar_select %p304, %s23, 0
      %s306 = sadd.s32 %s305, %s303
      %s307 = smul.addr %s306, 4
      %s308 = scalar_lea.vmem %s5, %s307
      %p309 = pneg %p207
      %p310 = pneg %p204
      %p311 = scmp.lt.s32.totalorder %s22, 1
      %s312 = scalar_select %p311, %s22, 1
      %p313 = scmp.lt.s32.totalorder %s23, 0
      %s314 = scalar_select %p313, %s23, 0
      %s315 = sadd.s32 %s314, %s312
      %s316 = smul.addr %s315, 4
      %s317 = scalar_lea.vmem %s6, %s316
      %s318 = smul.u32 4, %s23
      %p319 = scmp.lt.s32.totalorder %s22, 1
      %s320 = scalar_select %p319, %s22, 1
      %p321 = scmp.lt.s32.totalorder %s318, 3
      %s322 = scalar_select %p321, %s318, 3
      %s323 = smul.addr %s320, 4
      %s324 = sadd.s32 %s322, %s323
      %s325 = smul.addr %s324, 4
      %s326 = scalar_lea.vmem %s0, %s325
      %s327 = smul.u32 4, %s23
      %s328 = smul.u32 4, %s23
      %p329 = scmp.lt.s32.totalorder %s22, 1
      %s330 = scalar_select %p329, %s22, 1
      %p331 = scmp.lt.s32.totalorder %s328, 3
      %s332 = scalar_select %p331, %s328, 3
      %s333 = smul.addr %s330, 4
      %s334 = sadd.s32 %s332, %s333
      %s335 = scalar_lea.vmem %s1, %s334
      %s336 = smul.u32 4, %s23
      %s337 = smul.u32 4, %s23
      %p338 = scmp.lt.s32.totalorder %s22, 1
      %s339 = scalar_select %p338, %s22, 1
      %p340 = scmp.lt.s32.totalorder %s337, 3
      %s341 = scalar_select %p340, %s337, 3
      %s342 = smul.addr %s339, 4
      %s343 = sadd.s32 %s341, %s342
      %s344 = smul.addr %s343, 4
      %s345 = scalar_lea.vmem %s4, %s344
      %s346 = smul.u32 4, %s23
      %p347 = scmp.lt.s32.totalorder %s22, 1
      %s348 = scalar_select %p347, %s22, 1
      %p349 = scmp.lt.s32.totalorder %s23, 0
      %s350 = scalar_select %p349, %s23, 0
      %s351 = sadd.s32 %s350, %s348
      %s352 = smul.addr %s351, 4
      %s353 = scalar_lea.vmem %s5, %s352
      %p354 = scmp.lt.s32.totalorder %s22, 1
      %s355 = scalar_select %p354, %s22, 1
      %p356 = scmp.lt.s32.totalorder %s23, 0
      %s357 = scalar_select %p356, %s23, 0
      %s358 = sadd.s32 %s357, %s355
      %s359 = smul.addr %s358, 4
      %s360 = scalar_lea.vmem %s6, %s359
      %v361 = vld [vmem:[%s326] sm:$0xff]
      %v362 = vld [vmem:[%s326 + $0x8] sm:$0xff]
      %v363 = vld [vmem:[%s335] sm:$0xf]
      %v365 = vlaneseq
      %v366 = vshrl.u32 %v365, 7
      %v367 = vsub.s32 0, %v366
      %v368 = vrot.slane %v363, %v367
      %v369 = vlaneseq
      %v370 = vshrl.u32 %v369, 7
      %v371 = vsub.s32 1, %v370
      %v372 = vrot.slane %v363, %v371
      %v373 = vlaneseq
      %v374 = vshrl.u32 %v373, 7
      %v375 = vsub.s32 2, %v374
      %v376 = vrot.slane %v363, %v375
      %v377 = vlaneseq
      %v378 = vshrl.u32 %v377, 7
      %v379 = vsub.s32 3, %v378
      %v380 = vrot.slane %v363, %v379
      %v381 = vcombine.low %v368, %v372
      %v382 = vcombine.low %v376, %v380
      %v385 = vmul.f32 %v361, %v381
      %v386 = vmul.f32 %v362, %v382
      %v387 = vld [vmem:[%s2] sm:$0xf]
      %v388 = vld [vmem:[%s3] sm:$0xf]
      %390 = vset.pattern.permute.xlu0 0
      %391 = vperm.xlu0 %390, %v388
      %v392 = vpop.permute.xlu0 %391
      %v396 = vcombine.high %v385, %v385
      %v397 = vcombine.high %v386, %v386
      %vm398 = vcmask 31744
      %v400 = vsel %vm398, %v387, 0
      %vm402 = vcmask 1043456
      %v403 = vsel %vm402, %v385, 0
      %v405 = vsel %vm402, %v396, 0
      %v407 = vsel %vm402, %v386, 0
      %v409 = vsel %vm402, %v397, 0
      %411 = vmatprep.subr.mxu0 %v405
      %412 = vmatpush1.msra.mxu0 %v403
      %413 = vmatprep.subr.mxu0 0.0
      %414 = vmatpush1.msra.mxu0 0.0
      %415 = vmatprep.subr.mxu0 0.0
      %416 = vmatpush1.msra.mxu0 0.0
      %417 = vmatprep.subr.mxu0 0.0
      %418 = vmatpush1.msra.mxu0 0.0
      %419 = vmatprep.subr.mxu0 0.0
      %420 = vmatpush1.msra.mxu0 0.0
      %421 = vmatprep.subr.mxu0 0.0
      %422 = vmatpush1.msra.mxu0 0.0
      %423 = vmatprep.subr.mxu0 0.0
      %424 = vmatpush1.msra.mxu0 0.0
      %425 = vmatprep.subr.mxu0 0.0
      %426 = vmatpush1.msra.mxu0 0.0
      %427 = vmatprep.subr.mxu0 0.0
      %428 = vmatpush1.msra.mxu0 0.0
      %429 = vmatprep.subr.mxu0 0.0
      %430 = vmatpush1.msra.mxu0 0.0
      %431 = vmatprep.subr.mxu0 0.0
      %432 = vmatpush1.msra.mxu0 0.0
      %433 = vmatprep.subr.mxu0 0.0
      %434 = vmatpush1.msra.mxu0 0.0
      %435 = vmatprep.subr.mxu0 0.0
      %436 = vmatpush1.msra.mxu0 0.0
      %437 = vmatprep.subr.mxu0 0.0
      %438 = vmatpush1.msra.mxu0 0.0
      %439 = vmatprep.subr.mxu0 0.0
      %440 = vmatpush1.msra.mxu0 0.0
      %441 = vmatprep.subr.mxu0 0.0
      %442 = vmatpush1.msra.mxu0 0.0
      %443 = vmatprep.subr.mxu0 0.0
      %444 = vmatpush1.msra.mxu0 0.0
      %445 = vmatprep.subr.mxu0 0.0
      %446 = vmatpush1.msra.mxu0 0.0
      %447 = vmatprep.subr.mxu0 0.0
      %448 = vmatpush1.msra.mxu0 0.0
      %449 = vmatprep.subr.mxu0 0.0
      %450 = vmatpush1.msra.mxu0 0.0
      %451 = vmatprep.subr.mxu0 0.0
      %452 = vmatpush1.msra.mxu0 0.0
      %453 = vmatprep.subr.mxu0 0.0
      %454 = vmatpush1.msra.mxu0 0.0
      %455 = vmatprep.subr.mxu0 0.0
      %456 = vmatpush1.msra.mxu0 0.0
      %457 = vmatprep.subr.mxu0 0.0
      %458 = vmatpush1.msra.mxu0 0.0
      %459 = vmatprep.subr.mxu0 0.0
      %460 = vmatpush1.msra.mxu0 0.0
      %461 = vmatprep.subr.mxu0 0.0
      %462 = vmatpush1.msra.mxu0 0.0
      %463 = vmatprep.subr.mxu0 0.0
      %464 = vmatpush1.msra.mxu0 0.0
      %465 = vmatprep.subr.mxu0 0.0
      %466 = vmatpush1.msra.mxu0 0.0
      %467 = vmatprep.subr.mxu0 0.0
      %468 = vmatpush1.msra.mxu0 0.0
      %469 = vmatprep.subr.mxu0 0.0
      %470 = vmatpush1.msra.mxu0 0.0
      %471 = vmatprep.subr.mxu0 0.0
      %472 = vmatpush1.msra.mxu0 0.0
      %473 = vmatprep.subr.mxu0 0.0
      %474 = vmatpush1.msra.mxu0 0.0
      %475 = vmatprep.mubr.f32.mxu0 0.0
      %476 = vmatmul.mubr.f32.gmra.mrb[0].mxu0 %v400
      %v477 = vpop.f32.mrb[0].mxu0
      %v478 = vadd.f32 %v392, %v477
      %v479 = vpop.f32.mrb[0].mxu0
      %v480 = vadd.f32 %v392, %v479
      %481 = vdwg.mxu0
      %482 = vmatprep.subr.mxu0 %v409
      %483 = vmatpush1.msra.mxu0 %v407
      %484 = vmatprep.subr.mxu0 0.0
      %485 = vmatpush1.msra.mxu0 0.0
      %486 = vmatprep.subr.mxu0 0.0
      %487 = vmatpush1.msra.mxu0 0.0
      %488 = vmatprep.subr.mxu0 0.0
      %489 = vmatpush1.msra.mxu0 0.0
      %490 = vmatprep.subr.mxu0 0.0
      %491 = vmatpush1.msra.mxu0 0.0
      %492 = vmatprep.subr.mxu0 0.0
      %493 = vmatpush1.msra.mxu0 0.0
      %494 = vmatprep.subr.mxu0 0.0
      %495 = vmatpush1.msra.mxu0 0.0
      %496 = vmatprep.subr.mxu0 0.0
      %497 = vmatpush1.msra.mxu0 0.0
      %498 = vmatprep.subr.mxu0 0.0
      %499 = vmatpush1.msra.mxu0 0.0
      %500 = vmatprep.subr.mxu0 0.0
      %501 = vmatpush1.msra.mxu0 0.0
      %502 = vmatprep.subr.mxu0 0.0
      %503 = vmatpush1.msra.mxu0 0.0
      %504 = vmatprep.subr.mxu0 0.0
      %505 = vmatpush1.msra.mxu0 0.0
      %506 = vmatprep.subr.mxu0 0.0
      %507 = vmatpush1.msra.mxu0 0.0
      %508 = vmatprep.subr.mxu0 0.0
      %509 = vmatpush1.msra.mxu0 0.0
      %510 = vmatprep.subr.mxu0 0.0
      %511 = vmatpush1.msra.mxu0 0.0
      %512 = vmatprep.subr.mxu0 0.0
      %513 = vmatpush1.msra.mxu0 0.0
      %514 = vmatprep.subr.mxu0 0.0
      %515 = vmatpush1.msra.mxu0 0.0
      %516 = vmatprep.subr.mxu0 0.0
      %517 = vmatpush1.msra.mxu0 0.0
      %518 = vmatprep.subr.mxu0 0.0
      %519 = vmatpush1.msra.mxu0 0.0
      %520 = vmatprep.subr.mxu0 0.0
      %521 = vmatpush1.msra.mxu0 0.0
      %522 = vmatprep.subr.mxu0 0.0
      %523 = vmatpush1.msra.mxu0 0.0
      %524 = vmatprep.subr.mxu0 0.0
      %525 = vmatpush1.msra.mxu0 0.0
      %526 = vmatprep.subr.mxu0 0.0
      %527 = vmatpush1.msra.mxu0 0.0
      %528 = vmatprep.subr.mxu0 0.0
      %529 = vmatpush1.msra.mxu0 0.0
      %530 = vmatprep.subr.mxu0 0.0
      %531 = vmatpush1.msra.mxu0 0.0
      %532 = vmatprep.subr.mxu0 0.0
      %533 = vmatpush1.msra.mxu0 0.0
      %534 = vmatprep.subr.mxu0 0.0
      %535 = vmatpush1.msra.mxu0 0.0
      %536 = vmatprep.subr.mxu0 0.0
      %537 = vmatpush1.msra.mxu0 0.0
      %538 = vmatprep.subr.mxu0 0.0
      %539 = vmatpush1.msra.mxu0 0.0
      %540 = vmatprep.subr.mxu0 0.0
      %541 = vmatpush1.msra.mxu0 0.0
      %542 = vmatprep.subr.mxu0 0.0
      %543 = vmatpush1.msra.mxu0 0.0
      %544 = vmatprep.subr.mxu0 0.0
      %545 = vmatpush1.msra.mxu0 0.0
      %546 = vmatprep.mubr.f32.mxu0 0.0
      %547 = vmatmul.mubr.f32.gmra.mrb[0].mxu0 %v400
      %v548 = vpop.f32.mrb[0].mxu0
      %v549 = vadd.f32 %v392, %v548
      %v550 = vpop.f32.mrb[0].mxu0
      %v551 = vadd.f32 %v392, %v550
      %552 = vdwg.mxu0
      %v557 = vcombine.low %v478, %v480
      %v558 = vcombine.low %v549, %v551
      %561 = vst [vmem:[%s345] sm:$0xff] %v557
      %562 = vst [vmem:[%s345 + $0x8] sm:$0xff] %v558
      %v563 = vsel %vm402, %v478, 0.0
      %v564 = vsel %vm402, %v480, 0.0
      %v565 = vadd.f32 %v563, %v564
      %v566 = vsel %vm402, %v549, 0.0
      %v567 = vadd.f32 %v565, %v566
      %v568 = vsel %vm402, %v551, 0.0
      %v569 = vadd.f32 %v567, %v568
      %570 = vadd.xlane.f32.xlu0 %v569
      %v571 = vpop.xlane.xlu0 %570
      %vm572 = vcmask 3072
      %573 = vst.msk [vmem:[%s353] sm:$0xf] %vm572, %v571
      %v574 = vmul.f32 %v478, %v478
      %v575 = vmul.f32 %v480, %v480
      %v576 = vmul.f32 %v549, %v549
      %v577 = vmul.f32 %v551, %v551
      %v578 = vsel %vm402, %v574, 0.0
      %v579 = vsel %vm402, %v575, 0.0
      %v580 = vadd.f32 %v578, %v579
      %v581 = vsel %vm402, %v576, 0.0
      %v582 = vadd.f32 %v580, %v581
      %v583 = vsel %vm402, %v577, 0.0
      %v584 = vadd.f32 %v582, %v583
      %585 = vadd.xlane.f32.xlu0 %v584
      %v586 = vpop.xlane.xlu0 %585
      %587 = vst.msk [vmem:[%s360] sm:$0xf] %vm572, %v586
      %s588 = smul.u32 4, %s23
      %p589 = scmp.lt.s32.totalorder %s22, 1
      %s590 = scalar_select %p589, %s22, 1
      %p591 = scmp.lt.s32.totalorder %s588, 3
      %s592 = scalar_select %p591, %s588, 3
      %s593 = smul.addr %s590, 4
      %s594 = sadd.s32 %s592, %s593
      %s595 = smul.addr %s594, 4
      %s596 = scalar_lea.vmem %s4, %s595
      %p597 = scmp.lt.s32.totalorder %s22, 1
      %s598 = scalar_select %p597, %s22, 1
      %p599 = scmp.lt.s32.totalorder %s23, 0
      %s600 = scalar_select %p599, %s23, 0
      %s601 = sadd.s32 %s600, %s598
      %s602 = smul.addr %s601, 4
      %s603 = scalar_lea.vmem %s5, %s602
      %p604 = scmp.lt.s32.totalorder %s22, 1
      %s605 = scalar_select %p604, %s22, 1
      %p606 = scmp.lt.s32.totalorder %s23, 0
      %s607 = scalar_select %p606, %s23, 0
      %s608 = sadd.s32 %s607, %s605
      %s609 = smul.addr %s608, 4
      %s610 = scalar_lea.vmem %s6, %s609
      // Predicated region
      $region37: #{attention_gate_forward.5} parent=35 // pred_check
        %p611 = pneg %p148
      $region38: #{attention_gate_forward.5} parent=35 // pred_check_branch
        %613 = sbr.rel (%p611) target = $region40
      $region39: #{attention_gate_forward.5} parent=35 // pred_region
        %s614 = smul.u32 4, %s23
      $region40: #{attention_gate_forward.5} parent=35 // pred_fallthru
        _
      // Predicated region
      $region41: #{attention_gate_forward.5} parent=35 // pred_check
        %p615 = pneg %p176
      $region42: #{attention_gate_forward.5} parent=35 // pred_check_branch
        %617 = sbr.rel (%p615) target = $region44
      $region43: #{attention_gate_forward.5} parent=35 // pred_region
        _
      $region44: #{attention_gate_forward.5} parent=35 // pred_fallthru
        _
      // Predicated region
      $region45: #{attention_gate_forward.5} parent=35 // pred_check
        %p618 = pneg %p204
      $region46: #{attention_gate_forward.5} parent=35 // pred_check_branch
        %620 = sbr.rel (%p618) target = $region48
      $region47: #{attention_gate_forward.5} parent=35 // pred_region
        _
      $region48: #{attention_gate_forward.5} parent=35 // pred_fallthru
        _
    $region36: #{attention_gate_forward.5} parent=5 // pred_fallthru
      _
    %p621 = scmp.le.s32.totalorder 2, %s13
    // Predicated region
    $region49: #{attention_gate_forward.5} parent=5 // pred_check
      %p622 = pneg %p621
    $region50: #{attention_gate_forward.5} parent=5 // pred_check_branch
      %624 = sbr.rel (%p622) target = $region52
    $region51: #{attention_gate_forward.5} parent=5 // pred_region
      %s625 = ssub.s32 %s13, 2
      // Predicated region
      $region53: #{attention_gate_forward.5} parent=51 // pred_check
        %p626 = pneg %p154
      $region54: #{attention_gate_forward.5} parent=51 // pred_check_branch
        %628 = sbr.rel (%p626) target = $region56
      $region55: #{attention_gate_forward.5} parent=51 // pred_region
        %s629 = smul.u32 4, %s25
        %p630 = scmp.lt.s32.totalorder %s24, 1
        %s631 = scalar_select %p630, %s24, 1
        %p632 = scmp.lt.s32.totalorder %s629, 3
        %s633 = scalar_select %p632, %s629, 3
        %s634 = smul.addr %s631, 4
        %s635 = sadd.s32 %s633, %s634
        %s636 = smul.addr %s635, 4
        %s637 = scalar_lea.vmem %s4, %s636
      $region56: #{attention_gate_forward.5} parent=51 // pred_fallthru
        _
      // Predicated region
      $region57: #{attention_gate_forward.5} parent=51 // pred_check
        %p638 = pneg %p182
      $region58: #{attention_gate_forward.5} parent=51 // pred_check_branch
        %640 = sbr.rel (%p638) target = $region60
      $region59: #{attention_gate_forward.5} parent=51 // pred_region
        %p641 = scmp.lt.s32.totalorder %s24, 1
        %s642 = scalar_select %p641, %s24, 1
        %p643 = scmp.lt.s32.totalorder %s25, 0
        %s644 = scalar_select %p643, %s25, 0
        %s645 = sadd.s32 %s644, %s642
        %s646 = smul.addr %s645, 4
        %s647 = scalar_lea.vmem %s5, %s646
      $region60: #{attention_gate_forward.5} parent=51 // pred_fallthru
        _
      // Predicated region
      $region61: #{attention_gate_forward.5} parent=51 // pred_check
        %p648 = pneg %p210
      $region62: #{attention_gate_forward.5} parent=51 // pred_check_branch
        %650 = sbr.rel (%p648) target = $region64
      $region63: #{attention_gate_forward.5} parent=51 // pred_region
        %p651 = scmp.lt.s32.totalorder %s24, 1
        %s652 = scalar_select %p651, %s24, 1
        %p653 = scmp.lt.s32.totalorder %s25, 0
        %s654 = scalar_select %p653, %s25, 0
        %s655 = sadd.s32 %s654, %s652
        %s656 = smul.addr %s655, 4
        %s657 = scalar_lea.vmem %s6, %s656
      $region64: #{attention_gate_forward.5} parent=51 // pred_fallthru
        _
    $region52: #{attention_gate_forward.5} parent=5 // pred_fallthru
      _
  $region6: #{attention_gate_forward.5} parent=0 // loop_footer
    %s17 = sadd.s32 1, %s13
  $region7: #{attention_gate_forward.5} parent=0 // loop_footer_branch
    %12 = sbr.rel target = $region3
  $region8: #{attention_gate_forward.5} parent=0 // loop_exit
    _

</llo_original>
